<compile_context>
chip_gen: v6e
topology: v6e:2x2x1
jax: 0.10.0
libtpu: 0.0.40
codegen_flags: <defaults>
</compile_context>

<pallas_src>
import math

import jax
import jax.numpy as jnp
from jax.experimental import pallas as pl
from jax.experimental.pallas import tpu as pltpu

_VMEM_LIMIT = 48 * 1024 * 1024  # fits v7x (64 MiB/TC); conservative on v5e/v6e


def _pick_tile(dim, candidates):
    """Largest candidate that divides `dim`, else the full dim (valid block)."""
    for c in candidates:
        if dim % c == 0:
            return c
    return dim


# ----------------------------------------------------------------------------
# Kernel 1: tiled matmul + bias + fused per-column BN partial statistics
# ----------------------------------------------------------------------------
def _matmul_bias_stats_kernel(a_ref, b_ref, bias_ref, y_ref, ssum_ref, ssq_ref,
                              acc_ref):
    k = pl.program_id(2)

    @pl.when(k == 0)
    def _():
        acc_ref[...] = jnp.zeros_like(acc_ref)

    acc_ref[...] += jnp.dot(a_ref[...], b_ref[...],
                            preferred_element_type=jnp.float32)

    @pl.when(k == pl.num_programs(2) - 1)
    def _():
        y = acc_ref[...] + bias_ref[...]            # f32 epilogue
        y_ref[...] = y.astype(y_ref.dtype)
        # Partial BN statistics for this (M-tile, N-tile): saves a full HBM
        # re-read of the activation just to compute mean/var.
        ssum_ref[...] = jnp.sum(y, axis=0)[None, None, :]
        ssq_ref[...] = jnp.sum(y * y, axis=0)[None, None, :]


def matmul_bias_stats(a, b, bias):
    """(M,K) @ (K,N) + bias(N,) with fused per-column partial sum/sumsq.

    Returns (y (M,N) f32, ssum (Mt,1,N) f32, ssq (Mt,1,N) f32).
    """
    M, K = a.shape
    K2, N = b.shape
    assert K == K2

    # bf16 operands feed the bf16-native MXU on v6e/v7x (and are fine on v5e's
    # bf16 MXU); accumulation stays f32.  N tiles lane-dense (256 preferred for
    # the 2x256^2 MXUs, 128 also matches v5e's 4x128^2).
    TM = _pick_tile(M, (512, 256, 128, 64, 32, 16, 8))
    TN = _pick_tile(N, (256, 128))
    TK = _pick_tile(K, (512, 256, 128))
    Mt, Nt, Kt = M // TM, N // TN, K // TK

    a = a.astype(jnp.bfloat16)
    b = b.astype(jnp.bfloat16)
    bias2 = bias.reshape(1, N).astype(jnp.float32)

    return pl.pallas_call(
        _matmul_bias_stats_kernel,
        out_shape=(
            jax.ShapeDtypeStruct((M, N), jnp.float32),
            jax.ShapeDtypeStruct((Mt, 1, N), jnp.float32),
            jax.ShapeDtypeStruct((Mt, 1, N), jnp.float32),
        ),
        grid=(Mt, Nt, Kt),
        in_specs=[
            pl.BlockSpec((TM, TK), lambda i, j, k: (i, k)),
            pl.BlockSpec((TK, TN), lambda i, j, k: (k, j)),
            pl.BlockSpec((1, TN), lambda i, j, k: (0, j)),
        ],
        out_specs=(
            pl.BlockSpec((TM, TN), lambda i, j, k: (i, j)),
            pl.BlockSpec((1, 1, TN), lambda i, j, k: (i, 0, j)),
            pl.BlockSpec((1, 1, TN), lambda i, j, k: (i, 0, j)),
        ),
        scratch_shapes=[pltpu.VMEM((TM, TN), jnp.float32)],
        compiler_params=pltpu.CompilerParams(
            dimension_semantics=("parallel", "parallel", "arbitrary"),
            vmem_limit_bytes=_VMEM_LIMIT,
        ),
    )(a, b, bias2)


# ----------------------------------------------------------------------------
# Kernel 2: tiled per-column scale/shift (folded BatchNorm) + ReLU
# ----------------------------------------------------------------------------
def _scale_shift_relu_kernel(y_ref, scale_ref, shift_ref, o_ref):
    o_ref[...] = jnp.maximum(y_ref[...] * scale_ref[...] + shift_ref[...], 0.0)


def scale_shift_relu(y, col_scale, col_shift):
    M, N = y.shape
    TM = _pick_tile(M, (1024, 512, 256, 128, 64, 32, 16, 8))
    TN = _pick_tile(N, (512, 256, 128))
    return pl.pallas_call(
        _scale_shift_relu_kernel,
        out_shape=jax.ShapeDtypeStruct((M, N), jnp.float32),
        grid=(M // TM, N // TN),
        in_specs=[
            pl.BlockSpec((TM, TN), lambda i, j: (i, j)),
            pl.BlockSpec((1, TN), lambda i, j: (0, j)),
            pl.BlockSpec((1, TN), lambda i, j: (0, j)),
        ],
        out_specs=pl.BlockSpec((TM, TN), lambda i, j: (i, j)),
        compiler_params=pltpu.CompilerParams(
            dimension_semantics=("parallel", "parallel"),
            vmem_limit_bytes=_VMEM_LIMIT,
        ),
    )(y, col_scale.astype(jnp.float32), col_shift.astype(jnp.float32))


# ----------------------------------------------------------------------------
# Up block forward: ConvTranspose3d(k==stride, pad 0) -> BN3d(train) -> ReLU
# ----------------------------------------------------------------------------
def up_forward(x, w, b, gamma, beta, stride, eps=1e-5):
    """x: (B,D,H,W,Cin) NDHWC.  w: torch IODHW (Cin,Cout,kd,kh,kw).  b: (Cout,)."""
    B, D, H, W, Cin = x.shape
    kd, kh, kw = stride
    assert w.shape[0] == Cin and w.shape[2:] == (kd, kh, kw)
    Cout = w.shape[1]
    T = kd * kh * kw
    M = B * D * H * W
    N = T * Cout

    # ConvTranspose3d with kernel == stride, padding 0 has no overlapping taps:
    # it is exactly one matmul  (M, Cin) @ (Cin, T*Cout)  followed by a scatter
    # of the T tap groups into the upsampled spatial grid.
    a = x.reshape(M, Cin)
    wr = jnp.transpose(w, (0, 2, 3, 4, 1)).reshape(Cin, N)   # (Cin, (i,j,k,co))
    bias_cols = jnp.tile(b, (T,))                            # matches (i,j,k,co)

    y, ssum, ssq = matmul_bias_stats(a, wr, bias_cols)

    # BatchNorm3d training-mode batch stats from the fused partial sums
    # (tiny reduction: (Mt,1,N) -> (Cout,)).  Biased variance, f32 math.
    col_sum = jnp.sum(ssum, axis=(0, 1))                     # (N,)
    col_sq = jnp.sum(ssq, axis=(0, 1))                       # (N,)
    ch_sum = col_sum.reshape(T, Cout).sum(axis=0)            # (Cout,)
    ch_sq = col_sq.reshape(T, Cout).sum(axis=0)              # (Cout,)
    cnt = jnp.float32(M * T)
    mean = ch_sum / cnt
    var = jnp.maximum(ch_sq / cnt - mean * mean, 0.0)
    scale_c = gamma * jax.lax.rsqrt(var + eps)
    shift_c = beta - mean * scale_c
    col_scale = jnp.tile(scale_c, (T,)).reshape(1, N)
    col_shift = jnp.tile(shift_c, (T,)).reshape(1, N)

    z = scale_shift_relu(y, col_scale, col_shift)            # (M, N) f32

    # Scatter the tap groups into the upsampled layout (Cout stays last dim).
    # TODO(synk): fusing this relayout into the BN kernel's out_spec needs a
    # strided (kd,kh,kw)-interleaved output window that BlockSpec can't express
    # without in-kernel major-dim transposes; left as one XLA relayout pass.
    z = z.reshape(B, D, H, W, kd, kh, kw, Cout)
    z = jnp.transpose(z, (0, 1, 4, 2, 5, 3, 6, 7))
    return z.reshape(B, D * kd, H * kh, W * kw, Cout)


# ----------------------------------------------------------------------------
# Pure-JAX reference (same bf16-cast operands, f32 math) for a sanity check
# ----------------------------------------------------------------------------
def reference_up(x, w, b, gamma, beta, stride, eps=1e-5):
    B, D, H, W, Cin = x.shape
    kd, kh, kw = stride
    Cout = w.shape[1]
    T = kd * kh * kw
    a = x.reshape(-1, Cin).astype(jnp.bfloat16).astype(jnp.float32)
    wr = jnp.transpose(w, (0, 2, 3, 4, 1)).reshape(Cin, T * Cout)
    wr = wr.astype(jnp.bfloat16).astype(jnp.float32)
    y = jnp.dot(a, wr, precision=jax.lax.Precision.HIGHEST)
    y = y + jnp.tile(b, (T,))[None, :]
    y = y.reshape(B, D, H, W, kd, kh, kw, Cout)
    y = jnp.transpose(y, (0, 1, 4, 2, 5, 3, 6, 7))
    y = y.reshape(B, D * kd, H * kh, W * kw, Cout)
    mean = y.mean(axis=(0, 1, 2, 3))
    var = y.var(axis=(0, 1, 2, 3))
    yhat = (y - mean) * jax.lax.rsqrt(var + eps)
    return jnp.maximum(yhat * gamma + beta, 0.0)


if __name__ == "__main__":
    # Up(32, 16, kernel_size=(2,2,2), stride=(2,2,2)) -- the "up4" config.
    B, Cin, D, H, W = 2, 32, 4, 16, 16
    Cout = 16
    stride = (2, 2, 2)

    key = jax.random.PRNGKey(0)
    kx, kw_, kb, kg, kbe = jax.random.split(key, 5)

    x_ncdhw = jax.random.normal(kx, (B, Cin, D, H, W), jnp.float32)
    x = jnp.transpose(x_ncdhw, (0, 2, 3, 4, 1))  # NCDHW -> NDHWC

    fan_in = Cin * stride[0] * stride[1] * stride[2]
    bound = 1.0 / math.sqrt(fan_in)
    w = jax.random.uniform(kw_, (Cin, Cout) + stride, jnp.float32, -bound, bound)
    b = jax.random.uniform(kb, (Cout,), jnp.float32, -bound, bound)
    gamma = 1.0 + 0.1 * jax.random.normal(kg, (Cout,), jnp.float32)
    beta = 0.1 * jax.random.normal(kbe, (Cout,), jnp.float32)

    fwd = jax.jit(lambda xx: up_forward(xx, w, b, gamma, beta, stride))
    out_ndhwc = jax.block_until_ready(fwd(x))

    out_ncdhw = jnp.transpose(out_ndhwc, (0, 4, 1, 2, 3))
    assert out_ncdhw.shape == (B, Cout, D * 2, H * 2, W * 2), out_ncdhw.shape
    assert bool(jnp.all(jnp.isfinite(out_ncdhw)))

    ref = reference_up(x, w, b, gamma, beta, stride)
    max_err = float(jnp.max(jnp.abs(out_ndhwc - ref)))
    assert max_err < 1e-2, f"max abs error vs reference: {max_err}"

    print("KERNEL_OK")
</pallas_src>

<mosaic_0001>
module attributes {stable_mosaic.version = 11 : i64} {
  func.func @_matmul_bias_stats_kernel(%arg0: i32, %arg1: i32, %arg2: i32, %arg3: memref<512x32xbf16, #tpu.memory_space<vmem>>, %arg4: memref<32x128xbf16, #tpu.memory_space<vmem>>, %arg5: memref<1x128xf32, #tpu.memory_space<vmem>>, %arg6: memref<512x128xf32, #tpu.memory_space<vmem>>, %arg7: memref<1x1x128xf32, #tpu.memory_space<vmem>>, %arg8: memref<1x1x128xf32, #tpu.memory_space<vmem>>, %arg9: memref<512x128xf32, #tpu.memory_space<vmem>>) attributes {dimension_semantics = [#tpu.dimension_semantics<parallel>, #tpu.dimension_semantics<parallel>, #tpu.dimension_semantics<arbitrary>], iteration_bounds = array<i64: 4, 1, 1>, scalar_prefetch = 0 : i64, scratch_operands = 1 : i64, tpu.core_type = #tpu.core_type<tc>, window_params = [{transform_indices = @transform_0, window_bounds = array<i64: 512, 32>}, {transform_indices = @transform_1, window_bounds = array<i64: 32, 128>}, {transform_indices = @transform_2, window_bounds = array<i64: 1, 128>}, {transform_indices = @transform_3, window_bounds = array<i64: 512, 128>}, {transform_indices = @transform_4, window_bounds = array<i64: 1, 1, 128>}, {transform_indices = @transform_5, window_bounds = array<i64: 1, 1, 128>}]} {
    %c0_i32 = arith.constant 0 : i32
    %0 = arith.cmpi eq, %arg2, %c0_i32 : i32
    %1 = arith.extui %0 : i1 to i32
    %c0_i32_0 = arith.constant 0 : i32
    %2 = arith.cmpi ne, %1, %c0_i32_0 : i32
    scf.if %2 {
      %cst_10 = arith.constant 0.000000e+00 : f32
      %12 = vector.broadcast %cst_10 : f32 to vector<512x128xf32>
      %c0_11 = arith.constant 0 : index
      %c0_12 = arith.constant 0 : index
      %13 = vector.load %arg9[%c0_11, %c0_12] : memref<512x128xf32, #tpu.memory_space<vmem>>, vector<512x128xf32>
      tpu.vector_store %arg9[%c0_11, %c0_12], %12 {strides = array<i32>} : memref<512x128xf32, #tpu.memory_space<vmem>>, vector<512x128xf32>,
    } else {
    }
    %c0 = arith.constant 0 : index
    %c0_1 = arith.constant 0 : index
    %3 = vector.load %arg9[%c0, %c0_1] : memref<512x128xf32, #tpu.memory_space<vmem>>, vector<512x128xf32>
    %c0_2 = arith.constant 0 : index
    %c0_3 = arith.constant 0 : index
    %4 = vector.load %arg3[%c0_2, %c0_3] : memref<512x32xbf16, #tpu.memory_space<vmem>>, vector<512x32xbf16>
    %c0_4 = arith.constant 0 : index
    %c0_5 = arith.constant 0 : index
    %5 = vector.load %arg4[%c0_4, %c0_5] : memref<32x128xbf16, #tpu.memory_space<vmem>>, vector<32x128xbf16>
    %cst = arith.constant dense<0.000000e+00> : vector<512x128xf32>
    %6 = tpu.matmul %4, %5, %cst {dimension_numbers = #tpu.dot_dimension_numbers<[1], [0], [0], [1], [0, 0, 1, 1], [], []>} : vector<512x32xbf16>, vector<32x128xbf16>, vector<512x128xf32> -> vector<512x128xf32>
    %7 = arith.addf %3, %6 : vector<512x128xf32>
    %c0_6 = arith.constant 0 : index
    %c0_7 = arith.constant 0 : index
    %8 = vector.load %arg9[%c0_6, %c0_7] : memref<512x128xf32, #tpu.memory_space<vmem>>, vector<512x128xf32>
    tpu.vector_store %arg9[%c0_6, %c0_7], %7 {strides = array<i32>} : memref<512x128xf32, #tpu.memory_space<vmem>>, vector<512x128xf32>,
    %c0_i32_8 = arith.constant 0 : i32
    %9 = arith.cmpi eq, %arg2, %c0_i32_8 : i32
    %10 = arith.extui %9 : i1 to i32
    %c0_i32_9 = arith.constant 0 : i32
    %11 = arith.cmpi ne, %10, %c0_i32_9 : i32
    scf.if %11 {
      %c0_10 = arith.constant 0 : index
      %c0_11 = arith.constant 0 : index
      %12 = vector.load %arg9[%c0_10, %c0_11] : memref<512x128xf32, #tpu.memory_space<vmem>>, vector<512x128xf32>
      %c0_12 = arith.constant 0 : index
      %c0_13 = arith.constant 0 : index
      %13 = vector.load %arg5[%c0_12, %c0_13] : memref<1x128xf32, #tpu.memory_space<vmem>>, vector<1x128xf32>
      %14 = vector.broadcast %13 : vector<1x128xf32> to vector<512x128xf32>
      %15 = arith.addf %12, %14 : vector<512x128xf32>
      %c0_14 = arith.constant 0 : index
      %c0_15 = arith.constant 0 : index
      %16 = vector.load %arg6[%c0_14, %c0_15] : memref<512x128xf32, #tpu.memory_space<vmem>>, vector<512x128xf32>
      tpu.vector_store %arg6[%c0_14, %c0_15], %15 {strides = array<i32>} : memref<512x128xf32, #tpu.memory_space<vmem>>, vector<512x128xf32>,
      %cst_16 = arith.constant dense<0.000000e+00> : vector<128xf32>
      %17 = vector.multi_reduction <add>, %15, %cst_16 [0] : vector<512x128xf32> to vector<128xf32>
      %18 = vector.shape_cast %17 : vector<128xf32> to vector<1x1x128xf32>
      %c0_17 = arith.constant 0 : index
      %c0_18 = arith.constant 0 : index
      %c0_19 = arith.constant 0 : index
      %19 = vector.load %arg7[%c0_17, %c0_18, %c0_19] : memref<1x1x128xf32, #tpu.memory_space<vmem>>, vector<1x1x128xf32>
      tpu.vector_store %arg7[%c0_17, %c0_18, %c0_19], %18 {strides = array<i32>} : memref<1x1x128xf32, #tpu.memory_space<vmem>>, vector<1x1x128xf32>,
      %20 = arith.mulf %15, %15 : vector<512x128xf32>
      %cst_20 = arith.constant dense<0.000000e+00> : vector<128xf32>
      %21 = vector.multi_reduction <add>, %20, %cst_20 [0] : vector<512x128xf32> to vector<128xf32>
      %22 = vector.shape_cast %21 : vector<128xf32> to vector<1x1x128xf32>
      %c0_21 = arith.constant 0 : index
      %c0_22 = arith.constant 0 : index
      %c0_23 = arith.constant 0 : index
      %23 = vector.load %arg8[%c0_21, %c0_22, %c0_23] : memref<1x1x128xf32, #tpu.memory_space<vmem>>, vector<1x1x128xf32>
      tpu.vector_store %arg8[%c0_21, %c0_22, %c0_23], %22 {strides = array<i32>} : memref<1x1x128xf32, #tpu.memory_space<vmem>>, vector<1x1x128xf32>,
    } else {
    }
    return
  }
  func.func @transform_0(%arg0: i32, %arg1: i32, %arg2: i32) -> (i32, i32) {
    %c0_i32 = arith.constant 0 : i32
    return %arg0, %arg2 : i32, i32
  }
  func.func @transform_1(%arg0: i32, %arg1: i32, %arg2: i32) -> (i32, i32) {
    %c0_i32 = arith.constant 0 : i32
    return %arg2, %arg1 : i32, i32
  }
  func.func @transform_2(%arg0: i32, %arg1: i32, %arg2: i32) -> (i32, i32) {
    %c0_i32 = arith.constant 0 : i32
    %c0_i32_0 = arith.constant 0 : i32
    return %c0_i32, %arg1 : i32, i32
  }
  func.func @transform_3(%arg0: i32, %arg1: i32, %arg2: i32) -> (i32, i32) {
    %c0_i32 = arith.constant 0 : i32
    return %arg0, %arg1 : i32, i32
  }
  func.func @transform_4(%arg0: i32, %arg1: i32, %arg2: i32) -> (i32, i32, i32) {
    %c0_i32 = arith.constant 0 : i32
    %c0_i32_0 = arith.constant 0 : i32
    return %arg0, %c0_i32, %arg1 : i32, i32, i32
  }
  func.func @transform_5(%arg0: i32, %arg1: i32, %arg2: i32) -> (i32, i32, i32) {
    %c0_i32 = arith.constant 0 : i32
    %c0_i32_0 = arith.constant 0 : i32
    return %arg0, %c0_i32, %arg1 : i32, i32, i32
  }
}

module attributes {stable_mosaic.version = 11 : i64} {
  func.func @_scale_shift_relu_kernel(%arg0: i32, %arg1: i32, %arg2: memref<1024x128xf32, #tpu.memory_space<vmem>>, %arg3: memref<1x128xf32, #tpu.memory_space<vmem>>, %arg4: memref<1x128xf32, #tpu.memory_space<vmem>>, %arg5: memref<1024x128xf32, #tpu.memory_space<vmem>>) attributes {dimension_semantics = [#tpu.dimension_semantics<parallel>, #tpu.dimension_semantics<parallel>], iteration_bounds = array<i64: 2, 1>, scalar_prefetch = 0 : i64, scratch_operands = 0 : i64, tpu.core_type = #tpu.core_type<tc>, window_params = [{transform_indices = @transform_0, window_bounds = array<i64: 1024, 128>}, {transform_indices = @transform_1, window_bounds = array<i64: 1, 128>}, {transform_indices = @transform_2, window_bounds = array<i64: 1, 128>}, {transform_indices = @transform_3, window_bounds = array<i64: 1024, 128>}]} {
    %c0 = arith.constant 0 : index
    %c0_0 = arith.constant 0 : index
    %0 = vector.load %arg2[%c0, %c0_0] : memref<1024x128xf32, #tpu.memory_space<vmem>>, vector<1024x128xf32>
    %c0_1 = arith.constant 0 : index
    %c0_2 = arith.constant 0 : index
    %1 = vector.load %arg3[%c0_1, %c0_2] : memref<1x128xf32, #tpu.memory_space<vmem>>, vector<1x128xf32>
    %2 = vector.broadcast %1 : vector<1x128xf32> to vector<1024x128xf32>
    %3 = arith.mulf %0, %2 : vector<1024x128xf32>
    %c0_3 = arith.constant 0 : index
    %c0_4 = arith.constant 0 : index
    %4 = vector.load %arg4[%c0_3, %c0_4] : memref<1x128xf32, #tpu.memory_space<vmem>>, vector<1x128xf32>
    %5 = vector.broadcast %4 : vector<1x128xf32> to vector<1024x128xf32>
    %6 = arith.addf %3, %5 : vector<1024x128xf32>
    %cst = arith.constant 0.000000e+00 : f32
    %7 = vector.broadcast %cst : f32 to vector<1024x128xf32>
    %8 = arith.maximumf %6, %7 : vector<1024x128xf32>
    %c0_5 = arith.constant 0 : index
    %c0_6 = arith.constant 0 : index
    %9 = vector.load %arg5[%c0_5, %c0_6] : memref<1024x128xf32, #tpu.memory_space<vmem>>, vector<1024x128xf32>
    tpu.vector_store %arg5[%c0_5, %c0_6], %8 {strides = array<i32>} : memref<1024x128xf32, #tpu.memory_space<vmem>>, vector<1024x128xf32>,
    return
  }
  func.func @transform_0(%arg0: i32, %arg1: i32) -> (i32, i32) {
    %c0_i32 = arith.constant 0 : i32
    return %arg0, %arg1 : i32, i32
  }
  func.func @transform_1(%arg0: i32, %arg1: i32) -> (i32, i32) {
    %c0_i32 = arith.constant 0 : i32
    %c0_i32_0 = arith.constant 0 : i32
    return %c0_i32, %arg1 : i32, i32
  }
  func.func @transform_2(%arg0: i32, %arg1: i32) -> (i32, i32) {
    %c0_i32 = arith.constant 0 : i32
    %c0_i32_0 = arith.constant 0 : i32
    return %c0_i32, %arg1 : i32, i32
  }
  func.func @transform_3(%arg0: i32, %arg1: i32) -> (i32, i32) {
    %c0_i32 = arith.constant 0 : i32
    return %arg0, %arg1 : i32, i32
  }
}

</mosaic_0001>

<llo_original>
// kernel: tile.17
$region0: #{tile.17}
  %s0 = inlined_call_operand.vmem [shape: f32[8,16], index: 0, kind: input, shape index: {}]
  %s1 = inlined_call_operand.vmem [shape: f32[1,128], index: 1, kind: output, shape index: {}]
  $region1: #{tile.17} parent=0
    #allocation0 [shape = 'u8[4096]{0}', space=vmem, size = 0x1000, scoped, tag = 'scoped mem for output reshape']
    %v2 = vld [vmem:[%s0] sm:$0x1]
    %vm3 = vcmask 130048
    %4 = vst.msk [vmem:[#allocation0] sm:$0x1] %vm3, %v2
    %s5 = scalar_lea.vmem %s0, 7
    %v6 = vld [vmem:[%s5] sm:$0x1]
    %7 = vrot.lane.b32.xlu0 %v6, 112
    %v8 = vpop.permute.xlu0 %7
    %vm9 = vcmask 1048448
    %10 = vst.msk [vmem:[#allocation0] sm:$0x1] %vm9, %v8
    %s11 = scalar_lea.vmem %s0, 6
    %v12 = vld [vmem:[%s11] sm:$0x1]
    %13 = vrot.lane.b32.xlu0 %v12, 96
    %v14 = vpop.permute.xlu0 %13
    %vm15 = vcmask 917248
    %16 = vst.msk [vmem:[#allocation0] sm:$0x1] %vm15, %v14
    %s17 = scalar_lea.vmem %s0, 5
    %v18 = vld [vmem:[%s17] sm:$0x1]
    %19 = vrot.lane.b32.xlu0 %v18, 80
    %v20 = vpop.permute.xlu0 %19
    %vm21 = vcmask 786048
    %22 = vst.msk [vmem:[#allocation0] sm:$0x1] %vm21, %v20
    %s23 = scalar_lea.vmem %s0, 4
    %v24 = vld [vmem:[%s23] sm:$0x1]
    %25 = vrot.lane.b32.xlu0 %v24, 64
    %v26 = vpop.permute.xlu0 %25
    %vm27 = vcmask 654848
    %28 = vst.msk [vmem:[#allocation0] sm:$0x1] %vm27, %v26
    %s29 = scalar_lea.vmem %s0, 3
    %v30 = vld [vmem:[%s29] sm:$0x1]
    %31 = vrot.lane.b32.xlu0 %v30, 48
    %v32 = vpop.permute.xlu0 %31
    %vm33 = vcmask 523648
    %34 = vst.msk [vmem:[#allocation0] sm:$0x1] %vm33, %v32
    %s35 = scalar_lea.vmem %s0, 2
    %v36 = vld [vmem:[%s35] sm:$0x1]
    %37 = vrot.lane.b32.xlu0 %v36, 32
    %v38 = vpop.permute.xlu0 %37
    %vm39 = vcmask 392448
    %40 = vst.msk [vmem:[#allocation0] sm:$0x1] %vm39, %v38
    %s41 = scalar_lea.vmem %s0, 1
    %v42 = vld [vmem:[%s41] sm:$0x1]
    %43 = vrot.lane.b32.xlu0 %v42, 16
    %v44 = vpop.permute.xlu0 %43
    %vm45 = vcmask 261248
    %46 = vst.msk [vmem:[#allocation0] sm:$0x1] %vm45, %v44
    %s48 = sshll.u32 1, 1
    %s49 = ssub.s32 %s48, 1
    %v51 = vld [vmem:[#allocation0] sm:%s49]
    %s52 = sshll.u32 1, 1
    %s53 = ssub.s32 %s52, 1
    %54 = vst [vmem:[%s1] sm:%s53] %v51

// kernel: tile.16
$region0: #{tile.16}
  #allocation2 [shape = 's32[1]{0}', space=sflag, size = 0x4, scoped, tag = 'scoped memory for tile.16']
  %s0 = inlined_call_operand.hbm [shape: f32[16], index: 0, kind: input, shape index: {}]
  %s1 = inlined_call_operand.vmem [shape: f32[8,16], index: 1, kind: output, shape index: {}]
  $region1: #{tile.16} parent=0
    #allocation0 [shape = 'u8[512]{0}', space=vmem, size = 0x400, scoped, tag = 'operand span for operand 0']
    #allocation1 [shape = 's32[1]{0}', space=sflag, size = 0x4, scoped, tag = 'scoped memory for tile.16']
    %2 = vsyncpa [#allocation1], 0
    // Predicated region
    $region2: #{tile.16} parent=1 // pred_check
      _
    $region3: #{tile.16} parent=1 // pred_check_branch
      %4 = sbr.rel (0) target = $region5
    $region4: #{tile.16} parent=1 // pred_region
      %s6 = ssub.s32 16, 16
      %7 = vsyncadd [#allocation1], %s6
      %s9 = sshll.u32 [#allocation0], 4
      %s10 = int_to_ptr.vmem [resolvable:$true] %s9
      %12 = dma.hbm_to_vmem [thread:$0]  %s0, 16, %s10, [#allocation1]
    $region5: #{tile.16} parent=1 // pred_fallthru
      _
    // Predicated region
    $region6: #{tile.16} parent=1 // pred_check
      _
    $region7: #{tile.16} parent=1 // pred_check_branch
      %14 = sbr.rel (0) target = $region9
    $region8: #{tile.16} parent=1 // pred_region
      %15 = dma.done [#allocation1], 16
    $region9: #{tile.16} parent=1 // pred_fallthru
      _
    %v16 = vld [vmem:[#allocation0] ss:$0 sm:$0xff]
    %17 = vst [vmem:[%s1] sm:$0xff] %v16
    %18 = vsyncpa [#allocation1], 1

// kernel: tile.26
$region0: #{tile.26}
  #allocation0 [shape = 's32[1]{0}', space=sflag, size = 0x4, scoped, tag = 'scoped memory for tile.26']
  %s0 = inlined_call_operand.vmem [shape: f32[16], index: 0, kind: input, shape index: {}]
  %s1 = inlined_call_operand.vmem [shape: f32[8,16], index: 1, kind: output, shape index: {}]
  // Predicated region
  $region2: #{tile.26} parent=0 // pred_check
    _
  $region3: #{tile.26} parent=0 // pred_check_branch
    %3 = sbr.rel (0) target = $region5
  $region4: #{tile.26} parent=0 // pred_region
    _
  $region5: #{tile.26} parent=0 // pred_fallthru
    _
  %v4 = vld [vmem:[%s0] ss:$0 sm:$0xff]
  %5 = vst [vmem:[%s1] sm:$0xff] %v4

// kernel: _lambda_.3
$region0: #{_lambda_.3}
  #allocation0 [shape = 'u32[]', space=smem, size = 0x4, offset = 0x4, fixed_abs, tag = 'smem constant byte address 0x4 - core index']
  #allocation1 [shape = 'u32[144,128]{1,0:T(1,128)}', space=vmem, size = 0x12000, scoped, tag = 'internal scratch']
  %s0 = inlined_call_operand.vmem [shape: f32[2048,128], index: 0, kind: input, shape index: {}]
  %s1 = inlined_call_operand.vmem [shape: f32[1,128], index: 1, kind: input, shape index: {}]
  %s2 = inlined_call_operand.vmem [shape: f32[1,128], index: 2, kind: input, shape index: {}]
  %s3 = inlined_call_operand.vmem [shape: f32[2048,128], index: 3, kind: output, shape index: {}]
  %s4 = sld [smem:[#allocation0]]
  $region45: #{_lambda_.3} parent=0
    _
  %s6 = ssub.s32 1, %s4
  %s7 = scalar_select 0, %s6, %s4
  loop: start=0, step=1, limit=4
  $region2: #{_lambda_.3} parent=0 // loop_pre_header
    _
  $region3: #{_lambda_.3} parent=0 // loop_header
    %s9 = sphi 0, %s13
    %p10 = scmp.ge.s32.totalorder %s9, 4
    %s16 = sphi 0, %s28
    %s17 = sphi 0, %s24
    %s18 = sphi 0, %s16
    %s19 = sphi 0, %s17
    %s20 = sphi 0, %s18
    %s21 = sphi 0, %s19
    %s33 = sphi 0, %s35
    %s36 = sphi 0, %s33
    %s37 = sphi 0, %s36
    %s53 = sphi 0, %s37
    %s59 = sphi 0, %s61
    %s62 = sphi 0, %s59
    %s63 = sphi 0, %s62
    %s79 = sphi 0, %s63
    %s85 = sphi 0, %s87
    %s88 = sphi 0, %s85
    %s89 = sphi 0, %s88
    %s105 = sphi 0, %s89
    %s113 = sphi 0, %s115
    %s116 = sphi 0, %s113
    %s117 = sphi 0, %s116
    %s133 = sphi 0, %s117
  $region4: #{_lambda_.3} parent=0 // loop_header_branch
    %12 = sbr.rel (%p10) target = $region8
  $region5: #{_lambda_.3} parent=0 // loop_body
    %s14 = ssub.s32 %s9, 1
    %s15 = ssub.s32 %s9, 2
    %s22 = sadd.s32 1, %s17
    %p23 = scmp.ge.s32.totalorder %s22, 1
    %s24 = scalar_select %p23, 0, %s22
    %s25 = sadd.s32 1, %s16
    %s26 = scalar_select %p23, %s25, %s16
    %p27 = scmp.ge.s32.totalorder %s26, 2
    %s28 = scalar_select %p27, 0, %s26
    %s29 = ssub.s32 %s16, %s28
    %s30 = ssub.s32 %s17, %s24
    %s31 = sor.u32 %s29, %s30
    %p32 = scmp.eq.s32.totalorder %s31, 0
    %s34 = sadd.s32 %s33, 1
    %s35 = scalar_select %p32, %s33, %s34
    %p38 = pneg %p32
    %p39 = scmp.eq.s32.totalorder %s9, 1
    %p40 = por %p38, %p39
    %p41 = scmp.ne.s32.totalorder %s33, %s36
    %p42 = scmp.eq.s32.totalorder %s9, 0
    %p43 = por %p41, %p42
    %p44 = scmp.ne.s32.totalorder %s33, %s36
    %p45 = scmp.eq.s32.totalorder %s14, 1
    %p46 = por %p44, %p45
    %p47 = scmp.ne.s32.totalorder %s36, %s37
    %p48 = scmp.eq.s32.totalorder %s14, 0
    %p49 = por %p47, %p48
    %p50 = scmp.ne.s32.totalorder %s36, %s37
    %p51 = scmp.eq.s32.totalorder %s15, 1
    %p52 = por %p50, %p51
    %p54 = scmp.ne.s32.totalorder %s37, %s53
    %p55 = scmp.eq.s32.totalorder %s15, 0
    %p56 = por %p54, %p55
    %s57 = ssub.s32 %s17, %s24
    %p58 = scmp.eq.s32.totalorder %s57, 0
    %s60 = sadd.s32 %s59, 1
    %s61 = scalar_select %p58, %s59, %s60
    %p64 = pneg %p58
    %p65 = scmp.eq.s32.totalorder %s9, 1
    %p66 = por %p64, %p65
    %p67 = scmp.ne.s32.totalorder %s59, %s62
    %p68 = scmp.eq.s32.totalorder %s9, 0
    %p69 = por %p67, %p68
    %p70 = scmp.ne.s32.totalorder %s59, %s62
    %p71 = scmp.eq.s32.totalorder %s14, 1
    %p72 = por %p70, %p71
    %p73 = scmp.ne.s32.totalorder %s62, %s63
    %p74 = scmp.eq.s32.totalorder %s14, 0
    %p75 = por %p73, %p74
    %p76 = scmp.ne.s32.totalorder %s62, %s63
    %p77 = scmp.eq.s32.totalorder %s15, 1
    %p78 = por %p76, %p77
    %p80 = scmp.ne.s32.totalorder %s63, %s79
    %p81 = scmp.eq.s32.totalorder %s15, 0
    %p82 = por %p80, %p81
    %s83 = ssub.s32 %s17, %s24
    %p84 = scmp.eq.s32.totalorder %s83, 0
    %s86 = sadd.s32 %s85, 1
    %s87 = scalar_select %p84, %s85, %s86
    %p90 = pneg %p84
    %p91 = scmp.eq.s32.totalorder %s9, 1
    %p92 = por %p90, %p91
    %p93 = scmp.ne.s32.totalorder %s85, %s88
    %p94 = scmp.eq.s32.totalorder %s9, 0
    %p95 = por %p93, %p94
    %p96 = scmp.ne.s32.totalorder %s85, %s88
    %p97 = scmp.eq.s32.totalorder %s14, 1
    %p98 = por %p96, %p97
    %p99 = scmp.ne.s32.totalorder %s88, %s89
    %p100 = scmp.eq.s32.totalorder %s14, 0
    %p101 = por %p99, %p100
    %p102 = scmp.ne.s32.totalorder %s88, %s89
    %p103 = scmp.eq.s32.totalorder %s15, 1
    %p104 = por %p102, %p103
    %p106 = scmp.ne.s32.totalorder %s89, %s105
    %p107 = scmp.eq.s32.totalorder %s15, 0
    %p108 = por %p106, %p107
    %s109 = ssub.s32 %s16, %s28
    %s110 = ssub.s32 %s17, %s24
    %s111 = sor.u32 %s109, %s110
    %p112 = scmp.eq.s32.totalorder %s111, 0
    %s114 = sadd.s32 %s113, 1
    %s115 = scalar_select %p112, %s113, %s114
    %p118 = pneg %p112
    %p119 = scmp.eq.s32.totalorder %s9, 1
    %p120 = por %p118, %p119
    %p121 = scmp.ne.s32.totalorder %s113, %s116
    %p122 = scmp.eq.s32.totalorder %s9, 0
    %p123 = por %p121, %p122
    %p124 = scmp.ne.s32.totalorder %s113, %s116
    %p125 = scmp.eq.s32.totalorder %s14, 1
    %p126 = por %p124, %p125
    %p127 = scmp.ne.s32.totalorder %s116, %s117
    %p128 = scmp.eq.s32.totalorder %s14, 0
    %p129 = por %p127, %p128
    %p130 = scmp.ne.s32.totalorder %s116, %s117
    %p131 = scmp.eq.s32.totalorder %s15, 1
    %p132 = por %p130, %p131
    %p134 = scmp.ne.s32.totalorder %s117, %s133
    %p135 = scmp.eq.s32.totalorder %s15, 0
    %p136 = por %p134, %p135
    %p137 = scmp.le.s32.totalorder 1, %s9
    %p138 = scmp.lt.s32.totalorder %s9, 3
    %p139 = pnand %p137, %p138
    %p140 = pneg %p139
    // Predicated region
    $region9: #{_lambda_.3} parent=5 // pred_check
      _
    $region10: #{_lambda_.3} parent=5 // pred_check_branch
      %142 = sbr.rel (%p139) target = $region12
    $region11: #{_lambda_.3} parent=5 // pred_region
      %s143 = ssub.s32 %s9, 1
      // Predicated region
      $region13: #{_lambda_.3} parent=11 // pred_check
        %p144 = pneg %p75
      $region14: #{_lambda_.3} parent=11 // pred_check_branch
        %146 = sbr.rel (%p144) target = $region16
      $region15: #{_lambda_.3} parent=11 // pred_region
        %p147 = scmp.lt.s32.totalorder %s19, 0
        %s148 = scalar_select %p147, %s19, 0
        %s149 = scalar_lea.vmem %s1, %s148
      $region16: #{_lambda_.3} parent=11 // pred_fallthru
        _
      // Predicated region
      $region17: #{_lambda_.3} parent=11 // pred_check
        %p150 = pneg %p101
      $region18: #{_lambda_.3} parent=11 // pred_check_branch
        %152 = sbr.rel (%p150) target = $region20
      $region19: #{_lambda_.3} parent=11 // pred_region
        %p153 = scmp.lt.s32.totalorder %s19, 0
        %s154 = scalar_select %p153, %s19, 0
        %s155 = scalar_lea.vmem %s2, %s154
      $region20: #{_lambda_.3} parent=11 // pred_fallthru
        _
    $region12: #{_lambda_.3} parent=5 // pred_fallthru
      _
    %p156 = scmp.lt.s32.totalorder %s9, 2
    // Predicated region
    $region21: #{_lambda_.3} parent=5 // pred_check
      %p157 = pneg %p156
    $region22: #{_lambda_.3} parent=5 // pred_check_branch
      %159 = sbr.rel (%p157) target = $region24
    $region23: #{_lambda_.3} parent=5 // pred_region
      // Predicated region
      $region25: #{_lambda_.3} parent=23 // pred_check
        %p160 = pneg %p43
      $region26: #{_lambda_.3} parent=23 // pred_check_branch
        %162 = sbr.rel (%p160) target = $region28
      $region27: #{_lambda_.3} parent=23 // pred_region
        %s163 = smul.u32 128, %s16
        %p164 = scmp.lt.s32.totalorder %s163, 255
        %s165 = scalar_select %p164, %s163, 255
        %p166 = scmp.lt.s32.totalorder %s17, 0
        %s167 = scalar_select %p166, %s17, 0
        %s168 = sadd.s32 %s167, %s165
        %s169 = smul.addr %s168, 8
        %s170 = scalar_lea.vmem %s0, %s169
        %s171 = smul.u32 128, %s16
      $region28: #{_lambda_.3} parent=23 // pred_fallthru
        _
    $region24: #{_lambda_.3} parent=5 // pred_fallthru
      _
    %p172 = scmp.le.s32.totalorder 1, %s9
    %p173 = scmp.lt.s32.totalorder %s9, 3
    %p174 = pnand %p172, %p173
    %p175 = pneg %p174
    // Predicated region
    $region29: #{_lambda_.3} parent=5 // pred_check
      _
    $region30: #{_lambda_.3} parent=5 // pred_check_branch
      %177 = sbr.rel (%p174) target = $region32
    $region31: #{_lambda_.3} parent=5 // pred_region
      %s178 = ssub.s32 %s9, 1
      %s179 = smul.u32 128, %s18
      %p180 = scmp.lt.s32.totalorder %s179, 255
      %s181 = scalar_select %p180, %s179, 255
      %p182 = scmp.lt.s32.totalorder %s19, 0
      %s183 = scalar_select %p182, %s19, 0
      %s184 = sadd.s32 %s183, %s181
      %s185 = smul.addr %s184, 8
      %s186 = scalar_lea.vmem %s0, %s185
      %p187 = pneg %p49
      %p188 = pneg %p46
      %p189 = scmp.lt.s32.totalorder %s19, 0
      %s190 = scalar_select %p189, %s19, 0
      %s191 = scalar_lea.vmem %s1, %s190
      %p192 = pneg %p75
      %p193 = pneg %p72
      %p194 = scmp.lt.s32.totalorder %s19, 0
      %s195 = scalar_select %p194, %s19, 0
      %s196 = scalar_lea.vmem %s2, %s195
      %p197 = pneg %p101
      %p198 = pneg %p98
      %p199 = pneg %p129
      %p200 = pneg %p126
      %s201 = smul.u32 128, %s18
      %p202 = scmp.lt.s32.totalorder %s201, 255
      %s203 = scalar_select %p202, %s201, 255
      %p204 = scmp.lt.s32.totalorder %s19, 0
      %s205 = scalar_select %p204, %s19, 0
      %s206 = sadd.s32 %s205, %s203
      %s207 = smul.addr %s206, 8
      %s208 = scalar_lea.vmem %s3, %s207
      %s209 = smul.u32 128, %s18
      %p210 = scmp.lt.s32.totalorder %s209, 255
      %s211 = scalar_select %p210, %s209, 255
      %p212 = scmp.lt.s32.totalorder %s19, 0
      %s213 = scalar_select %p212, %s19, 0
      %s214 = sadd.s32 %s213, %s211
      %s215 = smul.addr %s214, 8
      %s216 = scalar_lea.vmem %s0, %s215
      %s217 = smul.u32 128, %s18
      %p218 = scmp.lt.s32.totalorder %s19, 0
      %s219 = scalar_select %p218, %s19, 0
      %s220 = scalar_lea.vmem %s1, %s219
      %p221 = scmp.lt.s32.totalorder %s19, 0
      %s222 = scalar_select %p221, %s19, 0
      %s223 = scalar_lea.vmem %s2, %s222
      %s224 = smul.u32 128, %s18
      %p225 = scmp.lt.s32.totalorder %s224, 255
      %s226 = scalar_select %p225, %s224, 255
      %p227 = scmp.lt.s32.totalorder %s19, 0
      %s228 = scalar_select %p227, %s19, 0
      %s229 = sadd.s32 %s228, %s226
      %s230 = smul.addr %s229, 8
      %s231 = scalar_lea.vmem %s3, %s230
      %s232 = smul.u32 128, %s18
      %v233 = vld [vmem:[%s216] sm:$0xff]
      %v234 = vld [vmem:[%s216 + $0x8] sm:$0xff]
      %v235 = vld [vmem:[%s216 + $0x10] sm:$0xff]
      %v236 = vld [vmem:[%s216 + $0x18] sm:$0xff]
      %v237 = vld [vmem:[%s216 + $0x20] sm:$0xff]
      %v238 = vld [vmem:[%s216 + $0x28] sm:$0xff]
      %v239 = vld [vmem:[%s216 + $0x30] sm:$0xff]
      %v240 = vld [vmem:[%s216 + $0x38] sm:$0xff]
      %v241 = vld [vmem:[%s216 + $0x40] sm:$0xff]
      %v242 = vld [vmem:[%s216 + $0x48] sm:$0xff]
      %v243 = vld [vmem:[%s216 + $0x50] sm:$0xff]
      %v244 = vld [vmem:[%s216 + $0x58] sm:$0xff]
      %v245 = vld [vmem:[%s216 + $0x60] sm:$0xff]
      %v246 = vld [vmem:[%s216 + $0x68] sm:$0xff]
      %v247 = vld [vmem:[%s216 + $0x70] sm:$0xff]
      %v248 = vld [vmem:[%s216 + $0x78] sm:$0xff]
      %v249 = vld [vmem:[%s216 + $0x80] sm:$0xff]
      %v250 = vld [vmem:[%s216 + $0x88] sm:$0xff]
      %v251 = vld [vmem:[%s216 + $0x90] sm:$0xff]
      %v252 = vld [vmem:[%s216 + $0x98] sm:$0xff]
      %v253 = vld [vmem:[%s216 + $0xa0] sm:$0xff]
      %v254 = vld [vmem:[%s216 + $0xa8] sm:$0xff]
      %v255 = vld [vmem:[%s216 + $0xb0] sm:$0xff]
      %v256 = vld [vmem:[%s216 + $0xb8] sm:$0xff]
      %v257 = vld [vmem:[%s216 + $0xc0] sm:$0xff]
      %v258 = vld [vmem:[%s216 + $0xc8] sm:$0xff]
      %v259 = vld [vmem:[%s216 + $0xd0] sm:$0xff]
      %v260 = vld [vmem:[%s216 + $0xd8] sm:$0xff]
      %v261 = vld [vmem:[%s216 + $0xe0] sm:$0xff]
      %v262 = vld [vmem:[%s216 + $0xe8] sm:$0xff]
      %v263 = vld [vmem:[%s216 + $0xf0] sm:$0xff]
      %v264 = vld [vmem:[%s216 + $0xf8] sm:$0xff]
      %v265 = vld [vmem:[%s216 + $0x100] sm:$0xff]
      %v266 = vld [vmem:[%s216 + $0x108] sm:$0xff]
      %v267 = vld [vmem:[%s216 + $0x110] sm:$0xff]
      %v268 = vld [vmem:[%s216 + $0x118] sm:$0xff]
      %v269 = vld [vmem:[%s216 + $0x120] sm:$0xff]
      %v270 = vld [vmem:[%s216 + $0x128] sm:$0xff]
      %v271 = vld [vmem:[%s216 + $0x130] sm:$0xff]
      %v272 = vld [vmem:[%s216 + $0x138] sm:$0xff]
      %v273 = vld [vmem:[%s216 + $0x140] sm:$0xff]
      %v274 = vld [vmem:[%s216 + $0x148] sm:$0xff]
      %v275 = vld [vmem:[%s216 + $0x150] sm:$0xff]
      %v276 = vld [vmem:[%s216 + $0x158] sm:$0xff]
      %v277 = vld [vmem:[%s216 + $0x160] sm:$0xff]
      %v278 = vld [vmem:[%s216 + $0x168] sm:$0xff]
      %v279 = vld [vmem:[%s216 + $0x170] sm:$0xff]
      %v280 = vld [vmem:[%s216 + $0x178] sm:$0xff]
      %v281 = vld [vmem:[%s216 + $0x180] sm:$0xff]
      %v282 = vld [vmem:[%s216 + $0x188] sm:$0xff]
      %v283 = vld [vmem:[%s216 + $0x190] sm:$0xff]
      %v284 = vld [vmem:[%s216 + $0x198] sm:$0xff]
      %v285 = vld [vmem:[%s216 + $0x1a0] sm:$0xff]
      %v286 = vld [vmem:[%s216 + $0x1a8] sm:$0xff]
      %v287 = vld [vmem:[%s216 + $0x1b0] sm:$0xff]
      %v288 = vld [vmem:[%s216 + $0x1b8] sm:$0xff]
      %v289 = vld [vmem:[%s216 + $0x1c0] sm:$0xff]
      %v290 = vld [vmem:[%s216 + $0x1c8] sm:$0xff]
      %v291 = vld [vmem:[%s216 + $0x1d0] sm:$0xff]
      %v292 = vld [vmem:[%s216 + $0x1d8] sm:$0xff]
      %v293 = vld [vmem:[%s216 + $0x1e0] sm:$0xff]
      %v294 = vld [vmem:[%s216 + $0x1e8] sm:$0xff]
      %v295 = vld [vmem:[%s216 + $0x1f0] sm:$0xff]
      %v296 = vld [vmem:[%s216 + $0x1f8] sm:$0xff]
      %v297 = vld [vmem:[%s216 + $0x200] sm:$0xff]
      %v298 = vld [vmem:[%s216 + $0x208] sm:$0xff]
      %v299 = vld [vmem:[%s216 + $0x210] sm:$0xff]
      %v300 = vld [vmem:[%s216 + $0x218] sm:$0xff]
      %v301 = vld [vmem:[%s216 + $0x220] sm:$0xff]
      %v302 = vld [vmem:[%s216 + $0x228] sm:$0xff]
      %v303 = vld [vmem:[%s216 + $0x230] sm:$0xff]
      %v304 = vld [vmem:[%s216 + $0x238] sm:$0xff]
      %v305 = vld [vmem:[%s216 + $0x240] sm:$0xff]
      %v306 = vld [vmem:[%s216 + $0x248] sm:$0xff]
      %v307 = vld [vmem:[%s216 + $0x250] sm:$0xff]
      %v308 = vld [vmem:[%s216 + $0x258] sm:$0xff]
      %v309 = vld [vmem:[%s216 + $0x260] sm:$0xff]
      %v310 = vld [vmem:[%s216 + $0x268] sm:$0xff]
      %v311 = vld [vmem:[%s216 + $0x270] sm:$0xff]
      %v312 = vld [vmem:[%s216 + $0x278] sm:$0xff]
      %v313 = vld [vmem:[%s216 + $0x280] sm:$0xff]
      %v314 = vld [vmem:[%s216 + $0x288] sm:$0xff]
      %v315 = vld [vmem:[%s216 + $0x290] sm:$0xff]
      %v316 = vld [vmem:[%s216 + $0x298] sm:$0xff]
      %v317 = vld [vmem:[%s216 + $0x2a0] sm:$0xff]
      %v318 = vld [vmem:[%s216 + $0x2a8] sm:$0xff]
      %v319 = vld [vmem:[%s216 + $0x2b0] sm:$0xff]
      %v320 = vld [vmem:[%s216 + $0x2b8] sm:$0xff]
      %v321 = vld [vmem:[%s216 + $0x2c0] sm:$0xff]
      %v322 = vld [vmem:[%s216 + $0x2c8] sm:$0xff]
      %v323 = vld [vmem:[%s216 + $0x2d0] sm:$0xff]
      %v324 = vld [vmem:[%s216 + $0x2d8] sm:$0xff]
      %v325 = vld [vmem:[%s216 + $0x2e0] sm:$0xff]
      %v326 = vld [vmem:[%s216 + $0x2e8] sm:$0xff]
      %v327 = vld [vmem:[%s216 + $0x2f0] sm:$0xff]
      %v328 = vld [vmem:[%s216 + $0x2f8] sm:$0xff]
      %v329 = vld [vmem:[%s216 + $0x300] sm:$0xff]
      %v330 = vld [vmem:[%s216 + $0x308] sm:$0xff]
      %v331 = vld [vmem:[%s216 + $0x310] sm:$0xff]
      %v332 = vld [vmem:[%s216 + $0x318] sm:$0xff]
      %v333 = vld [vmem:[%s216 + $0x320] sm:$0xff]
      %v334 = vld [vmem:[%s216 + $0x328] sm:$0xff]
      %v335 = vld [vmem:[%s216 + $0x330] sm:$0xff]
      %v336 = vld [vmem:[%s216 + $0x338] sm:$0xff]
      %v337 = vld [vmem:[%s216 + $0x340] sm:$0xff]
      %v338 = vld [vmem:[%s216 + $0x348] sm:$0xff]
      %v339 = vld [vmem:[%s216 + $0x350] sm:$0xff]
      %v340 = vld [vmem:[%s216 + $0x358] sm:$0xff]
      %v341 = vld [vmem:[%s216 + $0x360] sm:$0xff]
      %v342 = vld [vmem:[%s216 + $0x368] sm:$0xff]
      %v343 = vld [vmem:[%s216 + $0x370] sm:$0xff]
      %v344 = vld [vmem:[%s216 + $0x378] sm:$0xff]
      %v345 = vld [vmem:[%s216 + $0x380] sm:$0xff]
      %v346 = vld [vmem:[%s216 + $0x388] sm:$0xff]
      %v347 = vld [vmem:[%s216 + $0x390] sm:$0xff]
      %v348 = vld [vmem:[%s216 + $0x398] sm:$0xff]
      %v349 = vld [vmem:[%s216 + $0x3a0] sm:$0xff]
      %v350 = vld [vmem:[%s216 + $0x3a8] sm:$0xff]
      %v351 = vld [vmem:[%s216 + $0x3b0] sm:$0xff]
      %v352 = vld [vmem:[%s216 + $0x3b8] sm:$0xff]
      %v353 = vld [vmem:[%s216 + $0x3c0] sm:$0xff]
      %v354 = vld [vmem:[%s216 + $0x3c8] sm:$0xff]
      %v355 = vld [vmem:[%s216 + $0x3d0] sm:$0xff]
      %v356 = vld [vmem:[%s216 + $0x3d8] sm:$0xff]
      %v357 = vld [vmem:[%s216 + $0x3e0] sm:$0xff]
      %v358 = vld [vmem:[%s216 + $0x3e8] sm:$0xff]
      %v359 = vld [vmem:[%s216 + $0x3f0] sm:$0xff]
      %v360 = vld [vmem:[%s216 + $0x3f8] sm:$0xff]
      %v361 = vld [vmem:[%s220] sm:$0x1]
      %v363 = vlaneseq
      %v364 = vshrl.u32 %v363, 7
      %v365 = vsub.s32 0, %v364
      %v366 = vrot.slane %v361, %v365
      %v368 = vmul.f32 %v233, %v366
      %v369 = vmul.f32 %v234, %v366
      %v370 = vmul.f32 %v235, %v366
      %v371 = vmul.f32 %v236, %v366
      %v372 = vmul.f32 %v237, %v366
      %v373 = vmul.f32 %v238, %v366
      %v374 = vmul.f32 %v239, %v366
      %v375 = vmul.f32 %v240, %v366
      %v376 = vmul.f32 %v241, %v366
      %v377 = vmul.f32 %v242, %v366
      %v378 = vmul.f32 %v243, %v366
      %v379 = vmul.f32 %v244, %v366
      %v380 = vmul.f32 %v245, %v366
      %v381 = vmul.f32 %v246, %v366
      %v382 = vmul.f32 %v247, %v366
      %v383 = vmul.f32 %v248, %v366
      %v384 = vmul.f32 %v249, %v366
      %v385 = vmul.f32 %v250, %v366
      %v386 = vmul.f32 %v251, %v366
      %v387 = vmul.f32 %v252, %v366
      %v388 = vmul.f32 %v253, %v366
      %v389 = vmul.f32 %v254, %v366
      %v390 = vmul.f32 %v255, %v366
      %v391 = vmul.f32 %v256, %v366
      %v392 = vmul.f32 %v257, %v366
      %v393 = vmul.f32 %v258, %v366
      %v394 = vmul.f32 %v259, %v366
      %v395 = vmul.f32 %v260, %v366
      %v396 = vmul.f32 %v261, %v366
      %v397 = vmul.f32 %v262, %v366
      %v398 = vmul.f32 %v263, %v366
      %v399 = vmul.f32 %v264, %v366
      %v400 = vmul.f32 %v265, %v366
      %v401 = vmul.f32 %v266, %v366
      %v402 = vmul.f32 %v267, %v366
      %v403 = vmul.f32 %v268, %v366
      %v404 = vmul.f32 %v269, %v366
      %v405 = vmul.f32 %v270, %v366
      %v406 = vmul.f32 %v271, %v366
      %v407 = vmul.f32 %v272, %v366
      %v408 = vmul.f32 %v273, %v366
      %v409 = vmul.f32 %v274, %v366
      %v410 = vmul.f32 %v275, %v366
      %v411 = vmul.f32 %v276, %v366
      %v412 = vmul.f32 %v277, %v366
      %v413 = vmul.f32 %v278, %v366
      %v414 = vmul.f32 %v279, %v366
      %v415 = vmul.f32 %v280, %v366
      %v416 = vmul.f32 %v281, %v366
      %v417 = vmul.f32 %v282, %v366
      %v418 = vmul.f32 %v283, %v366
      %v419 = vmul.f32 %v284, %v366
      %v420 = vmul.f32 %v285, %v366
      %v421 = vmul.f32 %v286, %v366
      %v422 = vmul.f32 %v287, %v366
      %v423 = vmul.f32 %v288, %v366
      %v424 = vmul.f32 %v289, %v366
      %v425 = vmul.f32 %v290, %v366
      %v426 = vmul.f32 %v291, %v366
      %v427 = vmul.f32 %v292, %v366
      %v428 = vmul.f32 %v293, %v366
      %v429 = vmul.f32 %v294, %v366
      %v430 = vmul.f32 %v295, %v366
      %v431 = vmul.f32 %v296, %v366
      %v432 = vmul.f32 %v297, %v366
      %v433 = vmul.f32 %v298, %v366
      %v434 = vmul.f32 %v299, %v366
      %v435 = vmul.f32 %v300, %v366
      %v436 = vmul.f32 %v301, %v366
      %v437 = vmul.f32 %v302, %v366
      %v438 = vmul.f32 %v303, %v366
      %v439 = vmul.f32 %v304, %v366
      %v440 = vmul.f32 %v305, %v366
      %v441 = vmul.f32 %v306, %v366
      %v442 = vmul.f32 %v307, %v366
      %v443 = vmul.f32 %v308, %v366
      %v444 = vmul.f32 %v309, %v366
      %v445 = vmul.f32 %v310, %v366
      %v446 = vmul.f32 %v311, %v366
      %v447 = vmul.f32 %v312, %v366
      %v448 = vmul.f32 %v313, %v366
      %v449 = vmul.f32 %v314, %v366
      %v450 = vmul.f32 %v315, %v366
      %v451 = vmul.f32 %v316, %v366
      %v452 = vmul.f32 %v317, %v366
      %v453 = vmul.f32 %v318, %v366
      %v454 = vmul.f32 %v319, %v366
      %v455 = vmul.f32 %v320, %v366
      %v456 = vmul.f32 %v321, %v366
      %v457 = vmul.f32 %v322, %v366
      %v458 = vmul.f32 %v323, %v366
      %v459 = vmul.f32 %v324, %v366
      %v460 = vmul.f32 %v325, %v366
      %v461 = vmul.f32 %v326, %v366
      %v462 = vmul.f32 %v327, %v366
      %v463 = vmul.f32 %v328, %v366
      %v464 = vmul.f32 %v329, %v366
      %v465 = vmul.f32 %v330, %v366
      %v466 = vmul.f32 %v331, %v366
      %v467 = vmul.f32 %v332, %v366
      %v468 = vmul.f32 %v333, %v366
      %v469 = vmul.f32 %v334, %v366
      %v470 = vmul.f32 %v335, %v366
      %v471 = vmul.f32 %v336, %v366
      %v472 = vmul.f32 %v337, %v366
      %v473 = vmul.f32 %v338, %v366
      %v474 = vmul.f32 %v339, %v366
      %v475 = vmul.f32 %v340, %v366
      %v476 = vmul.f32 %v341, %v366
      %v477 = vmul.f32 %v342, %v366
      %v478 = vmul.f32 %v343, %v366
      %v479 = vmul.f32 %v344, %v366
      %v480 = vmul.f32 %v345, %v366
      %v481 = vmul.f32 %v346, %v366
      %v482 = vmul.f32 %v347, %v366
      %v483 = vmul.f32 %v348, %v366
      %v484 = vmul.f32 %v349, %v366
      %v485 = vmul.f32 %v350, %v366
      %v486 = vmul.f32 %v351, %v366
      %v487 = vmul.f32 %v352, %v366
      %v488 = vmul.f32 %v353, %v366
      %v489 = vmul.f32 %v354, %v366
      %v490 = vmul.f32 %v355, %v366
      %v491 = vmul.f32 %v356, %v366
      %v492 = vmul.f32 %v357, %v366
      %v493 = vmul.f32 %v358, %v366
      %v494 = vmul.f32 %v359, %v366
      %v495 = vmul.f32 %v360, %v366
      %v496 = vld [vmem:[%s223] sm:$0x1]
      %v498 = vlaneseq
      %v499 = vshrl.u32 %v498, 7
      %v500 = vsub.s32 0, %v499
      %v501 = vrot.slane %v496, %v500
      %v503 = vadd.f32 %v368, %v501
      %v504 = vadd.f32 %v369, %v501
      %v505 = vadd.f32 %v370, %v501
      %v506 = vadd.f32 %v371, %v501
      %v507 = vadd.f32 %v372, %v501
      %v508 = vadd.f32 %v373, %v501
      %v509 = vadd.f32 %v374, %v501
      %v510 = vadd.f32 %v375, %v501
      %v511 = vadd.f32 %v376, %v501
      %v512 = vadd.f32 %v377, %v501
      %v513 = vadd.f32 %v378, %v501
      %v514 = vadd.f32 %v379, %v501
      %v515 = vadd.f32 %v380, %v501
      %v516 = vadd.f32 %v381, %v501
      %v517 = vadd.f32 %v382, %v501
      %v518 = vadd.f32 %v383, %v501
      %v519 = vadd.f32 %v384, %v501
      %v520 = vadd.f32 %v385, %v501
      %v521 = vadd.f32 %v386, %v501
      %v522 = vadd.f32 %v387, %v501
      %v523 = vadd.f32 %v388, %v501
      %v524 = vadd.f32 %v389, %v501
      %v525 = vadd.f32 %v390, %v501
      %v526 = vadd.f32 %v391, %v501
      %v527 = vadd.f32 %v392, %v501
      %v528 = vadd.f32 %v393, %v501
      %v529 = vadd.f32 %v394, %v501
      %v530 = vadd.f32 %v395, %v501
      %v531 = vadd.f32 %v396, %v501
      %v532 = vadd.f32 %v397, %v501
      %v533 = vadd.f32 %v398, %v501
      %v534 = vadd.f32 %v399, %v501
      %v535 = vadd.f32 %v400, %v501
      %v536 = vadd.f32 %v401, %v501
      %v537 = vadd.f32 %v402, %v501
      %v538 = vadd.f32 %v403, %v501
      %v539 = vadd.f32 %v404, %v501
      %v540 = vadd.f32 %v405, %v501
      %v541 = vadd.f32 %v406, %v501
      %v542 = vadd.f32 %v407, %v501
      %v543 = vadd.f32 %v408, %v501
      %v544 = vadd.f32 %v409, %v501
      %v545 = vadd.f32 %v410, %v501
      %v546 = vadd.f32 %v411, %v501
      %v547 = vadd.f32 %v412, %v501
      %v548 = vadd.f32 %v413, %v501
      %v549 = vadd.f32 %v414, %v501
      %v550 = vadd.f32 %v415, %v501
      %v551 = vadd.f32 %v416, %v501
      %v552 = vadd.f32 %v417, %v501
      %v553 = vadd.f32 %v418, %v501
      %v554 = vadd.f32 %v419, %v501
      %v555 = vadd.f32 %v420, %v501
      %v556 = vadd.f32 %v421, %v501
      %v557 = vadd.f32 %v422, %v501
      %v558 = vadd.f32 %v423, %v501
      %v559 = vadd.f32 %v424, %v501
      %v560 = vadd.f32 %v425, %v501
      %v561 = vadd.f32 %v426, %v501
      %v562 = vadd.f32 %v427, %v501
      %v563 = vadd.f32 %v428, %v501
      %v564 = vadd.f32 %v429, %v501
      %v565 = vadd.f32 %v430, %v501
      %v566 = vadd.f32 %v431, %v501
      %v567 = vadd.f32 %v432, %v501
      %v568 = vadd.f32 %v433, %v501
      %v569 = vadd.f32 %v434, %v501
      %v570 = vadd.f32 %v435, %v501
      %v571 = vadd.f32 %v436, %v501
      %v572 = vadd.f32 %v437, %v501
      %v573 = vadd.f32 %v438, %v501
      %v574 = vadd.f32 %v439, %v501
      %v575 = vadd.f32 %v440, %v501
      %v576 = vadd.f32 %v441, %v501
      %v577 = vadd.f32 %v442, %v501
      %v578 = vadd.f32 %v443, %v501
      %v579 = vadd.f32 %v444, %v501
      %v580 = vadd.f32 %v445, %v501
      %v581 = vadd.f32 %v446, %v501
      %v582 = vadd.f32 %v447, %v501
      %v583 = vadd.f32 %v448, %v501
      %v584 = vadd.f32 %v449, %v501
      %v585 = vadd.f32 %v450, %v501
      %v586 = vadd.f32 %v451, %v501
      %v587 = vadd.f32 %v452, %v501
      %v588 = vadd.f32 %v453, %v501
      %v589 = vadd.f32 %v454, %v501
      %v590 = vadd.f32 %v455, %v501
      %v591 = vadd.f32 %v456, %v501
      %v592 = vadd.f32 %v457, %v501
      %v593 = vadd.f32 %v458, %v501
      %v594 = vadd.f32 %v459, %v501
      %v595 = vadd.f32 %v460, %v501
      %v596 = vadd.f32 %v461, %v501
      %v597 = vadd.f32 %v462, %v501
      %v598 = vadd.f32 %v463, %v501
      %v599 = vadd.f32 %v464, %v501
      %v600 = vadd.f32 %v465, %v501
      %v601 = vadd.f32 %v466, %v501
      %v602 = vadd.f32 %v467, %v501
      %v603 = vadd.f32 %v468, %v501
      %v604 = vadd.f32 %v469, %v501
      %v605 = vadd.f32 %v470, %v501
      %v606 = vadd.f32 %v471, %v501
      %v607 = vadd.f32 %v472, %v501
      %v608 = vadd.f32 %v473, %v501
      %v609 = vadd.f32 %v474, %v501
      %v610 = vadd.f32 %v475, %v501
      %v611 = vadd.f32 %v476, %v501
      %v612 = vadd.f32 %v477, %v501
      %v613 = vadd.f32 %v478, %v501
      %v614 = vadd.f32 %v479, %v501
      %v615 = vadd.f32 %v480, %v501
      %v616 = vadd.f32 %v481, %v501
      %v617 = vadd.f32 %v482, %v501
      %v618 = vadd.f32 %v483, %v501
      %v619 = vadd.f32 %v484, %v501
      %v620 = vadd.f32 %v485, %v501
      %v621 = vadd.f32 %v486, %v501
      %v622 = vadd.f32 %v487, %v501
      %v623 = vadd.f32 %v488, %v501
      %v624 = vadd.f32 %v489, %v501
      %v625 = vadd.f32 %v490, %v501
      %v626 = vadd.f32 %v491, %v501
      %v627 = vadd.f32 %v492, %v501
      %v628 = vadd.f32 %v493, %v501
      %v629 = vadd.f32 %v494, %v501
      %v630 = vadd.f32 %v495, %v501
      %v631 = vmax.f32 %v503, 0.0
      %v632 = vmax.f32 %v504, 0.0
      %v633 = vmax.f32 %v505, 0.0
      %v634 = vmax.f32 %v506, 0.0
      %v635 = vmax.f32 %v507, 0.0
      %v636 = vmax.f32 %v508, 0.0
      %v637 = vmax.f32 %v509, 0.0
      %v638 = vmax.f32 %v510, 0.0
      %v639 = vmax.f32 %v511, 0.0
      %v640 = vmax.f32 %v512, 0.0
      %v641 = vmax.f32 %v513, 0.0
      %v642 = vmax.f32 %v514, 0.0
      %v643 = vmax.f32 %v515, 0.0
      %v644 = vmax.f32 %v516, 0.0
      %v645 = vmax.f32 %v517, 0.0
      %v646 = vmax.f32 %v518, 0.0
      %v647 = vmax.f32 %v519, 0.0
      %v648 = vmax.f32 %v520, 0.0
      %v649 = vmax.f32 %v521, 0.0
      %v650 = vmax.f32 %v522, 0.0
      %v651 = vmax.f32 %v523, 0.0
      %v652 = vmax.f32 %v524, 0.0
      %v653 = vmax.f32 %v525, 0.0
      %v654 = vmax.f32 %v526, 0.0
      %v655 = vmax.f32 %v527, 0.0
      %v656 = vmax.f32 %v528, 0.0
      %v657 = vmax.f32 %v529, 0.0
      %v658 = vmax.f32 %v530, 0.0
      %v659 = vmax.f32 %v531, 0.0
      %v660 = vmax.f32 %v532, 0.0
      %v661 = vmax.f32 %v533, 0.0
      %v662 = vmax.f32 %v534, 0.0
      %v663 = vmax.f32 %v535, 0.0
      %v664 = vmax.f32 %v536, 0.0
      %v665 = vmax.f32 %v537, 0.0
      %v666 = vmax.f32 %v538, 0.0
      %v667 = vmax.f32 %v539, 0.0
      %v668 = vmax.f32 %v540, 0.0
      %v669 = vmax.f32 %v541, 0.0
      %v670 = vmax.f32 %v542, 0.0
      %v671 = vmax.f32 %v543, 0.0
      %v672 = vmax.f32 %v544, 0.0
      %v673 = vmax.f32 %v545, 0.0
      %v674 = vmax.f32 %v546, 0.0
      %v675 = vmax.f32 %v547, 0.0
      %v676 = vmax.f32 %v548, 0.0
      %v677 = vmax.f32 %v549, 0.0
      %v678 = vmax.f32 %v550, 0.0
      %v679 = vmax.f32 %v551, 0.0
      %v680 = vmax.f32 %v552, 0.0
      %v681 = vmax.f32 %v553, 0.0
      %v682 = vmax.f32 %v554, 0.0
      %v683 = vmax.f32 %v555, 0.0
      %v684 = vmax.f32 %v556, 0.0
      %v685 = vmax.f32 %v557, 0.0
      %v686 = vmax.f32 %v558, 0.0
      %v687 = vmax.f32 %v559, 0.0
      %v688 = vmax.f32 %v560, 0.0
      %v689 = vmax.f32 %v561, 0.0
      %v690 = vmax.f32 %v562, 0.0
      %v691 = vmax.f32 %v563, 0.0
      %v692 = vmax.f32 %v564, 0.0
      %v693 = vmax.f32 %v565, 0.0
      %v694 = vmax.f32 %v566, 0.0
      %v695 = vmax.f32 %v567, 0.0
      %v696 = vmax.f32 %v568, 0.0
      %v697 = vmax.f32 %v569, 0.0
      %v698 = vmax.f32 %v570, 0.0
      %v699 = vmax.f32 %v571, 0.0
      %v700 = vmax.f32 %v572, 0.0
      %v701 = vmax.f32 %v573, 0.0
      %v702 = vmax.f32 %v574, 0.0
      %v703 = vmax.f32 %v575, 0.0
      %v704 = vmax.f32 %v576, 0.0
      %v705 = vmax.f32 %v577, 0.0
      %v706 = vmax.f32 %v578, 0.0
      %v707 = vmax.f32 %v579, 0.0
      %v708 = vmax.f32 %v580, 0.0
      %v709 = vmax.f32 %v581, 0.0
      %v710 = vmax.f32 %v582, 0.0
      %v711 = vmax.f32 %v583, 0.0
      %v712 = vmax.f32 %v584, 0.0
      %v713 = vmax.f32 %v585, 0.0
      %v714 = vmax.f32 %v586, 0.0
      %v715 = vmax.f32 %v587, 0.0
      %v716 = vmax.f32 %v588, 0.0
      %v717 = vmax.f32 %v589, 0.0
      %v718 = vmax.f32 %v590, 0.0
      %v719 = vmax.f32 %v591, 0.0
      %v720 = vmax.f32 %v592, 0.0
      %v721 = vmax.f32 %v593, 0.0
      %v722 = vmax.f32 %v594, 0.0
      %v723 = vmax.f32 %v595, 0.0
      %v724 = vmax.f32 %v596, 0.0
      %v725 = vmax.f32 %v597, 0.0
      %v726 = vmax.f32 %v598, 0.0
      %v727 = vmax.f32 %v599, 0.0
      %v728 = vmax.f32 %v600, 0.0
      %v729 = vmax.f32 %v601, 0.0
      %v730 = vmax.f32 %v602, 0.0
      %v731 = vmax.f32 %v603, 0.0
      %v732 = vmax.f32 %v604, 0.0
      %v733 = vmax.f32 %v605, 0.0
      %v734 = vmax.f32 %v606, 0.0
      %v735 = vmax.f32 %v607, 0.0
      %v736 = vmax.f32 %v608, 0.0
      %v737 = vmax.f32 %v609, 0.0
      %v738 = vmax.f32 %v610, 0.0
      %v739 = vmax.f32 %v611, 0.0
      %v740 = vmax.f32 %v612, 0.0
      %v741 = vmax.f32 %v613, 0.0
      %v742 = vmax.f32 %v614, 0.0
      %v743 = vmax.f32 %v615, 0.0
      %v744 = vmax.f32 %v616, 0.0
      %v745 = vmax.f32 %v617, 0.0
      %v746 = vmax.f32 %v618, 0.0
      %v747 = vmax.f32 %v619, 0.0
      %v748 = vmax.f32 %v620, 0.0
      %v749 = vmax.f32 %v621, 0.0
      %v750 = vmax.f32 %v622, 0.0
      %v751 = vmax.f32 %v623, 0.0
      %v752 = vmax.f32 %v624, 0.0
      %v753 = vmax.f32 %v625, 0.0
      %v754 = vmax.f32 %v626, 0.0
      %v755 = vmax.f32 %v627, 0.0
      %v756 = vmax.f32 %v628, 0.0
      %v757 = vmax.f32 %v629, 0.0
      %v758 = vmax.f32 %v630, 0.0
      %759 = vst [vmem:[%s231] sm:$0xff] %v631
      %760 = vst [vmem:[%s231 + $0x8] sm:$0xff] %v632
      %761 = vst [vmem:[%s231 + $0x10] sm:$0xff] %v633
      %762 = vst [vmem:[%s231 + $0x18] sm:$0xff] %v634
      %763 = vst [vmem:[%s231 + $0x20] sm:$0xff] %v635
      %764 = vst [vmem:[%s231 + $0x28] sm:$0xff] %v636
      %765 = vst [vmem:[%s231 + $0x30] sm:$0xff] %v637
      %766 = vst [vmem:[%s231 + $0x38] sm:$0xff] %v638
      %767 = vst [vmem:[%s231 + $0x40] sm:$0xff] %v639
      %768 = vst [vmem:[%s231 + $0x48] sm:$0xff] %v640
      %769 = vst [vmem:[%s231 + $0x50] sm:$0xff] %v641
      %770 = vst [vmem:[%s231 + $0x58] sm:$0xff] %v642
      %771 = vst [vmem:[%s231 + $0x60] sm:$0xff] %v643
      %772 = vst [vmem:[%s231 + $0x68] sm:$0xff] %v644
      %773 = vst [vmem:[%s231 + $0x70] sm:$0xff] %v645
      %774 = vst [vmem:[%s231 + $0x78] sm:$0xff] %v646
      %775 = vst [vmem:[%s231 + $0x80] sm:$0xff] %v647
      %776 = vst [vmem:[%s231 + $0x88] sm:$0xff] %v648
      %777 = vst [vmem:[%s231 + $0x90] sm:$0xff] %v649
      %778 = vst [vmem:[%s231 + $0x98] sm:$0xff] %v650
      %779 = vst [vmem:[%s231 + $0xa0] sm:$0xff] %v651
      %780 = vst [vmem:[%s231 + $0xa8] sm:$0xff] %v652
      %781 = vst [vmem:[%s231 + $0xb0] sm:$0xff] %v653
      %782 = vst [vmem:[%s231 + $0xb8] sm:$0xff] %v654
      %783 = vst [vmem:[%s231 + $0xc0] sm:$0xff] %v655
      %784 = vst [vmem:[%s231 + $0xc8] sm:$0xff] %v656
      %785 = vst [vmem:[%s231 + $0xd0] sm:$0xff] %v657
      %786 = vst [vmem:[%s231 + $0xd8] sm:$0xff] %v658
      %787 = vst [vmem:[%s231 + $0xe0] sm:$0xff] %v659
      %788 = vst [vmem:[%s231 + $0xe8] sm:$0xff] %v660
      %789 = vst [vmem:[%s231 + $0xf0] sm:$0xff] %v661
      %790 = vst [vmem:[%s231 + $0xf8] sm:$0xff] %v662
      %791 = vst [vmem:[%s231 + $0x100] sm:$0xff] %v663
      %792 = vst [vmem:[%s231 + $0x108] sm:$0xff] %v664
      %793 = vst [vmem:[%s231 + $0x110] sm:$0xff] %v665
      %794 = vst [vmem:[%s231 + $0x118] sm:$0xff] %v666
      %795 = vst [vmem:[%s231 + $0x120] sm:$0xff] %v667
      %796 = vst [vmem:[%s231 + $0x128] sm:$0xff] %v668
      %797 = vst [vmem:[%s231 + $0x130] sm:$0xff] %v669
      %798 = vst [vmem:[%s231 + $0x138] sm:$0xff] %v670
      %799 = vst [vmem:[%s231 + $0x140] sm:$0xff] %v671
      %800 = vst [vmem:[%s231 + $0x148] sm:$0xff] %v672
      %801 = vst [vmem:[%s231 + $0x150] sm:$0xff] %v673
      %802 = vst [vmem:[%s231 + $0x158] sm:$0xff] %v674
      %803 = vst [vmem:[%s231 + $0x160] sm:$0xff] %v675
      %804 = vst [vmem:[%s231 + $0x168] sm:$0xff] %v676
      %805 = vst [vmem:[%s231 + $0x170] sm:$0xff] %v677
      %806 = vst [vmem:[%s231 + $0x178] sm:$0xff] %v678
      %807 = vst [vmem:[%s231 + $0x180] sm:$0xff] %v679
      %808 = vst [vmem:[%s231 + $0x188] sm:$0xff] %v680
      %809 = vst [vmem:[%s231 + $0x190] sm:$0xff] %v681
      %810 = vst [vmem:[%s231 + $0x198] sm:$0xff] %v682
      %811 = vst [vmem:[%s231 + $0x1a0] sm:$0xff] %v683
      %812 = vst [vmem:[%s231 + $0x1a8] sm:$0xff] %v684
      %813 = vst [vmem:[%s231 + $0x1b0] sm:$0xff] %v685
      %814 = vst [vmem:[%s231 + $0x1b8] sm:$0xff] %v686
      %815 = vst [vmem:[%s231 + $0x1c0] sm:$0xff] %v687
      %816 = vst [vmem:[%s231 + $0x1c8] sm:$0xff] %v688
      %817 = vst [vmem:[%s231 + $0x1d0] sm:$0xff] %v689
      %818 = vst [vmem:[%s231 + $0x1d8] sm:$0xff] %v690
      %819 = vst [vmem:[%s231 + $0x1e0] sm:$0xff] %v691
      %820 = vst [vmem:[%s231 + $0x1e8] sm:$0xff] %v692
      %821 = vst [vmem:[%s231 + $0x1f0] sm:$0xff] %v693
      %822 = vst [vmem:[%s231 + $0x1f8] sm:$0xff] %v694
      %823 = vst [vmem:[%s231 + $0x200] sm:$0xff] %v695
      %824 = vst [vmem:[%s231 + $0x208] sm:$0xff] %v696
      %825 = vst [vmem:[%s231 + $0x210] sm:$0xff] %v697
      %826 = vst [vmem:[%s231 + $0x218] sm:$0xff] %v698
      %827 = vst [vmem:[%s231 + $0x220] sm:$0xff] %v699
      %828 = vst [vmem:[%s231 + $0x228] sm:$0xff] %v700
      %829 = vst [vmem:[%s231 + $0x230] sm:$0xff] %v701
      %830 = vst [vmem:[%s231 + $0x238] sm:$0xff] %v702
      %831 = vst [vmem:[%s231 + $0x240] sm:$0xff] %v703
      %832 = vst [vmem:[%s231 + $0x248] sm:$0xff] %v704
      %833 = vst [vmem:[%s231 + $0x250] sm:$0xff] %v705
      %834 = vst [vmem:[%s231 + $0x258] sm:$0xff] %v706
      %835 = vst [vmem:[%s231 + $0x260] sm:$0xff] %v707
      %836 = vst [vmem:[%s231 + $0x268] sm:$0xff] %v708
      %837 = vst [vmem:[%s231 + $0x270] sm:$0xff] %v709
      %838 = vst [vmem:[%s231 + $0x278] sm:$0xff] %v710
      %839 = vst [vmem:[%s231 + $0x280] sm:$0xff] %v711
      %840 = vst [vmem:[%s231 + $0x288] sm:$0xff] %v712
      %841 = vst [vmem:[%s231 + $0x290] sm:$0xff] %v713
      %842 = vst [vmem:[%s231 + $0x298] sm:$0xff] %v714
      %843 = vst [vmem:[%s231 + $0x2a0] sm:$0xff] %v715
      %844 = vst [vmem:[%s231 + $0x2a8] sm:$0xff] %v716
      %845 = vst [vmem:[%s231 + $0x2b0] sm:$0xff] %v717
      %846 = vst [vmem:[%s231 + $0x2b8] sm:$0xff] %v718
      %847 = vst [vmem:[%s231 + $0x2c0] sm:$0xff] %v719
      %848 = vst [vmem:[%s231 + $0x2c8] sm:$0xff] %v720
      %849 = vst [vmem:[%s231 + $0x2d0] sm:$0xff] %v721
      %850 = vst [vmem:[%s231 + $0x2d8] sm:$0xff] %v722
      %851 = vst [vmem:[%s231 + $0x2e0] sm:$0xff] %v723
      %852 = vst [vmem:[%s231 + $0x2e8] sm:$0xff] %v724
      %853 = vst [vmem:[%s231 + $0x2f0] sm:$0xff] %v725
      %854 = vst [vmem:[%s231 + $0x2f8] sm:$0xff] %v726
      %855 = vst [vmem:[%s231 + $0x300] sm:$0xff] %v727
      %856 = vst [vmem:[%s231 + $0x308] sm:$0xff] %v728
      %857 = vst [vmem:[%s231 + $0x310] sm:$0xff] %v729
      %858 = vst [vmem:[%s231 + $0x318] sm:$0xff] %v730
      %859 = vst [vmem:[%s231 + $0x320] sm:$0xff] %v731
      %860 = vst [vmem:[%s231 + $0x328] sm:$0xff] %v732
      %861 = vst [vmem:[%s231 + $0x330] sm:$0xff] %v733
      %862 = vst [vmem:[%s231 + $0x338] sm:$0xff] %v734
      %863 = vst [vmem:[%s231 + $0x340] sm:$0xff] %v735
      %864 = vst [vmem:[%s231 + $0x348] sm:$0xff] %v736
      %865 = vst [vmem:[%s231 + $0x350] sm:$0xff] %v737
      %866 = vst [vmem:[%s231 + $0x358] sm:$0xff] %v738
      %867 = vst [vmem:[%s231 + $0x360] sm:$0xff] %v739
      %868 = vst [vmem:[%s231 + $0x368] sm:$0xff] %v740
      %869 = vst [vmem:[%s231 + $0x370] sm:$0xff] %v741
      %870 = vst [vmem:[%s231 + $0x378] sm:$0xff] %v742
      %871 = vst [vmem:[%s231 + $0x380] sm:$0xff] %v743
      %872 = vst [vmem:[%s231 + $0x388] sm:$0xff] %v744
      %873 = vst [vmem:[%s231 + $0x390] sm:$0xff] %v745
      %874 = vst [vmem:[%s231 + $0x398] sm:$0xff] %v746
      %875 = vst [vmem:[%s231 + $0x3a0] sm:$0xff] %v747
      %876 = vst [vmem:[%s231 + $0x3a8] sm:$0xff] %v748
      %877 = vst [vmem:[%s231 + $0x3b0] sm:$0xff] %v749
      %878 = vst [vmem:[%s231 + $0x3b8] sm:$0xff] %v750
      %879 = vst [vmem:[%s231 + $0x3c0] sm:$0xff] %v751
      %880 = vst [vmem:[%s231 + $0x3c8] sm:$0xff] %v752
      %881 = vst [vmem:[%s231 + $0x3d0] sm:$0xff] %v753
      %882 = vst [vmem:[%s231 + $0x3d8] sm:$0xff] %v754
      %883 = vst [vmem:[%s231 + $0x3e0] sm:$0xff] %v755
      %884 = vst [vmem:[%s231 + $0x3e8] sm:$0xff] %v756
      %885 = vst [vmem:[%s231 + $0x3f0] sm:$0xff] %v757
      %886 = vst [vmem:[%s231 + $0x3f8] sm:$0xff] %v758
      %s887 = smul.u32 128, %s18
      %p888 = scmp.lt.s32.totalorder %s887, 255
      %s889 = scalar_select %p888, %s887, 255
      %p890 = scmp.lt.s32.totalorder %s19, 0
      %s891 = scalar_select %p890, %s19, 0
      %s892 = sadd.s32 %s891, %s889
      %s893 = smul.addr %s892, 8
      %s894 = scalar_lea.vmem %s3, %s893
      // Predicated region
      $region33: #{_lambda_.3} parent=31 // pred_check
        %p895 = pneg %p126
      $region34: #{_lambda_.3} parent=31 // pred_check_branch
        %897 = sbr.rel (%p895) target = $region36
      $region35: #{_lambda_.3} parent=31 // pred_region
        %s898 = smul.u32 128, %s18
      $region36: #{_lambda_.3} parent=31 // pred_fallthru
        _
    $region32: #{_lambda_.3} parent=5 // pred_fallthru
      _
    %p899 = scmp.le.s32.totalorder 2, %s9
    // Predicated region
    $region37: #{_lambda_.3} parent=5 // pred_check
      %p900 = pneg %p899
    $region38: #{_lambda_.3} parent=5 // pred_check_branch
      %902 = sbr.rel (%p900) target = $region40
    $region39: #{_lambda_.3} parent=5 // pred_region
      %s903 = ssub.s32 %s9, 2
      // Predicated region
      $region41: #{_lambda_.3} parent=39 // pred_check
        %p904 = pneg %p132
      $region42: #{_lambda_.3} parent=39 // pred_check_branch
        %906 = sbr.rel (%p904) target = $region44
      $region43: #{_lambda_.3} parent=39 // pred_region
        %s907 = smul.u32 128, %s20
        %p908 = scmp.lt.s32.totalorder %s907, 255
        %s909 = scalar_select %p908, %s907, 255
        %p910 = scmp.lt.s32.totalorder %s21, 0
        %s911 = scalar_select %p910, %s21, 0
        %s912 = sadd.s32 %s911, %s909
        %s913 = smul.addr %s912, 8
        %s914 = scalar_lea.vmem %s3, %s913
      $region44: #{_lambda_.3} parent=39 // pred_fallthru
        _
    $region40: #{_lambda_.3} parent=5 // pred_fallthru
      _
  $region6: #{_lambda_.3} parent=0 // loop_footer
    %s13 = sadd.s32 1, %s9
  $region7: #{_lambda_.3} parent=0 // loop_footer_branch
    %8 = sbr.rel target = $region3
  $region8: #{_lambda_.3} parent=0 // loop_exit
    _

// kernel: _lambda_.2
$region0: #{_lambda_.2}
  #allocation0 [shape = 'u32[]', space=smem, size = 0x4, offset = 0x4, fixed_abs, tag = 'smem constant byte address 0x4 - core index']
  #allocation1 [shape = 'u32[144,128]{1,0:T(1,128)}', space=vmem, size = 0x12000, scoped, tag = 'internal scratch']
  #allocation2 [shape = 'f32[512,128]{1,0:T(8,128)}', space=vmem, size = 0x40000, scoped, tag = 'scratch operand']
  %s0 = inlined_call_operand.vmem [shape: bf16[2048,32], index: 0, kind: input, shape index: {}]
  %s1 = inlined_call_operand.hbm [shape: bf16[32,128], index: 1, kind: input, shape index: {}]
  %s2 = inlined_call_operand.vmem [shape: f32[1,128], index: 2, kind: input, shape index: {}]
  %s3 = inlined_call_operand.vmem [shape: f32[2048,128], index: 3, kind: output, shape index: {0}]
  %s4 = inlined_call_operand.vmem [shape: f32[4,1,128], index: 4, kind: output, shape index: {1}]
  %s5 = inlined_call_operand.vmem [shape: f32[4,1,128], index: 5, kind: output, shape index: {2}]
  %6 = xla_tuple %s3, %s4, %s5
  %s7 = sld [smem:[#allocation0]]
  $region73: #{_lambda_.2} parent=0
    _
  %s9 = ssub.s32 1, %s7
  %s10 = scalar_select 0, %s9, %s7
  $region1: #{_lambda_.2} parent=0
    #allocation3 [shape = 'u8[8192]{0}', space=vmem, size = 0x2000, scoped, tag = 'input window, operand 1, single buffered']
    #allocation4 [shape = 's32[2]{0}', space=sflag, size = 0x8, scoped, tag = 'scoped memory for _lambda_.2']
    %11 = vsyncpa [#allocation4], 0
    loop: start=0, step=1, limit=6
    $region2: #{_lambda_.2} parent=1 // loop_pre_header
      _
    $region3: #{_lambda_.2} parent=1 // loop_header
      %s13 = sphi 0, %s17
      %p14 = scmp.ge.s32.totalorder %s13, 6
      %s20 = sphi 0, %s39
      %s21 = sphi 0, %s35
      %s22 = sphi 0, %s31
      %s23 = sphi 0, %s20
      %s24 = sphi 0, %s21
      %s25 = sphi 0, %s22
      %s26 = sphi 0, %s23
      %s27 = sphi 0, %s24
      %s28 = sphi 0, %s25
      %s44 = sphi 0, %s46
      %s47 = sphi 0, %s44
      %s48 = sphi 0, %s47
      %s64 = sphi 0, %s48
      %s72 = sphi 0, %s74
      %s75 = sphi 0, %s72
      %s76 = sphi 0, %s75
      %s92 = sphi 0, %s76
      %s98 = sphi 0, %s100
      %s101 = sphi 0, %s98
      %s102 = sphi 0, %s101
      %s118 = sphi 0, %s102
      %s126 = sphi 0, %s128
      %s129 = sphi 0, %s126
      %s130 = sphi 0, %s129
      %s146 = sphi 0, %s130
      %s154 = sphi 0, %s156
      %s157 = sphi 0, %s154
      %s158 = sphi 0, %s157
      %s174 = sphi 0, %s158
      %s182 = sphi 0, %s184
      %s185 = sphi 0, %s182
      %s186 = sphi 0, %s185
      %s202 = sphi 0, %s186
    $region4: #{_lambda_.2} parent=1 // loop_header_branch
      %16 = sbr.rel (%p14) target = $region8
    $region5: #{_lambda_.2} parent=1 // loop_body
      %s18 = ssub.s32 %s13, 1
      %s19 = ssub.s32 %s13, 2
      %s29 = sadd.s32 1, %s22
      %p30 = scmp.ge.s32.totalorder %s29, 1
      %s31 = scalar_select %p30, 0, %s29
      %s32 = sadd.s32 1, %s21
      %s33 = scalar_select %p30, %s32, %s21
      %p34 = scmp.ge.s32.totalorder %s33, 1
      %s35 = scalar_select %p34, 0, %s33
      %s36 = sadd.s32 1, %s20
      %s37 = scalar_select %p34, %s36, %s20
      %p38 = scmp.ge.s32.totalorder %s37, 4
      %s39 = scalar_select %p38, 0, %s37
      %s40 = ssub.s32 %s20, %s39
      %s41 = ssub.s32 %s22, %s31
      %s42 = sor.u32 %s40, %s41
      %p43 = scmp.eq.s32.totalorder %s42, 0
      %s45 = sadd.s32 %s44, 1
      %s46 = scalar_select %p43, %s44, %s45
      %p49 = pneg %p43
      %p50 = scmp.eq.s32.totalorder %s13, 3
      %p51 = por %p49, %p50
      %p52 = scmp.ne.s32.totalorder %s44, %s47
      %p53 = scmp.eq.s32.totalorder %s13, 0
      %p54 = por %p52, %p53
      %p55 = scmp.ne.s32.totalorder %s44, %s47
      %p56 = scmp.eq.s32.totalorder %s18, 3
      %p57 = por %p55, %p56
      %p58 = scmp.ne.s32.totalorder %s47, %s48
      %p59 = scmp.eq.s32.totalorder %s18, 0
      %p60 = por %p58, %p59
      %p61 = scmp.ne.s32.totalorder %s47, %s48
      %p62 = scmp.eq.s32.totalorder %s19, 3
      %p63 = por %p61, %p62
      %p65 = scmp.ne.s32.totalorder %s48, %s64
      %p66 = scmp.eq.s32.totalorder %s19, 0
      %p67 = por %p65, %p66
      %s68 = ssub.s32 %s22, %s31
      %s69 = ssub.s32 %s21, %s35
      %s70 = sor.u32 %s68, %s69
      %p71 = scmp.eq.s32.totalorder %s70, 0
      %s73 = sadd.s32 %s72, 1
      %s74 = scalar_select %p71, %s72, %s73
      %p77 = pneg %p71
      %p78 = scmp.eq.s32.totalorder %s13, 3
      %p79 = por %p77, %p78
      %p80 = scmp.ne.s32.totalorder %s72, %s75
      %p81 = scmp.eq.s32.totalorder %s13, 0
      %p82 = por %p80, %p81
      %p83 = scmp.ne.s32.totalorder %s72, %s75
      %p84 = scmp.eq.s32.totalorder %s18, 3
      %p85 = por %p83, %p84
      %p86 = scmp.ne.s32.totalorder %s75, %s76
      %p87 = scmp.eq.s32.totalorder %s18, 0
      %p88 = por %p86, %p87
      %p89 = scmp.ne.s32.totalorder %s75, %s76
      %p90 = scmp.eq.s32.totalorder %s19, 3
      %p91 = por %p89, %p90
      %p93 = scmp.ne.s32.totalorder %s76, %s92
      %p94 = scmp.eq.s32.totalorder %s19, 0
      %p95 = por %p93, %p94
      %s96 = ssub.s32 %s21, %s35
      %p97 = scmp.eq.s32.totalorder %s96, 0
      %s99 = sadd.s32 %s98, 1
      %s100 = scalar_select %p97, %s98, %s99
      %p103 = pneg %p97
      %p104 = scmp.eq.s32.totalorder %s13, 3
      %p105 = por %p103, %p104
      %p106 = scmp.ne.s32.totalorder %s98, %s101
      %p107 = scmp.eq.s32.totalorder %s13, 0
      %p108 = por %p106, %p107
      %p109 = scmp.ne.s32.totalorder %s98, %s101
      %p110 = scmp.eq.s32.totalorder %s18, 3
      %p111 = por %p109, %p110
      %p112 = scmp.ne.s32.totalorder %s101, %s102
      %p113 = scmp.eq.s32.totalorder %s18, 0
      %p114 = por %p112, %p113
      %p115 = scmp.ne.s32.totalorder %s101, %s102
      %p116 = scmp.eq.s32.totalorder %s19, 3
      %p117 = por %p115, %p116
      %p119 = scmp.ne.s32.totalorder %s102, %s118
      %p120 = scmp.eq.s32.totalorder %s19, 0
      %p121 = por %p119, %p120
      %s122 = ssub.s32 %s20, %s39
      %s123 = ssub.s32 %s21, %s35
      %s124 = sor.u32 %s122, %s123
      %p125 = scmp.eq.s32.totalorder %s124, 0
      %s127 = sadd.s32 %s126, 1
      %s128 = scalar_select %p125, %s126, %s127
      %p131 = pneg %p125
      %p132 = scmp.eq.s32.totalorder %s13, 3
      %p133 = por %p131, %p132
      %p134 = scmp.ne.s32.totalorder %s126, %s129
      %p135 = scmp.eq.s32.totalorder %s13, 0
      %p136 = por %p134, %p135
      %p137 = scmp.ne.s32.totalorder %s126, %s129
      %p138 = scmp.eq.s32.totalorder %s18, 3
      %p139 = por %p137, %p138
      %p140 = scmp.ne.s32.totalorder %s129, %s130
      %p141 = scmp.eq.s32.totalorder %s18, 0
      %p142 = por %p140, %p141
      %p143 = scmp.ne.s32.totalorder %s129, %s130
      %p144 = scmp.eq.s32.totalorder %s19, 3
      %p145 = por %p143, %p144
      %p147 = scmp.ne.s32.totalorder %s130, %s146
      %p148 = scmp.eq.s32.totalorder %s19, 0
      %p149 = por %p147, %p148
      %s150 = ssub.s32 %s20, %s39
      %s151 = ssub.s32 %s21, %s35
      %s152 = sor.u32 %s150, %s151
      %p153 = scmp.eq.s32.totalorder %s152, 0
      %s155 = sadd.s32 %s154, 1
      %s156 = scalar_select %p153, %s154, %s155
      %p159 = pneg %p153
      %p160 = scmp.eq.s32.totalorder %s13, 3
      %p161 = por %p159, %p160
      %p162 = scmp.ne.s32.totalorder %s154, %s157
      %p163 = scmp.eq.s32.totalorder %s13, 0
      %p164 = por %p162, %p163
      %p165 = scmp.ne.s32.totalorder %s154, %s157
      %p166 = scmp.eq.s32.totalorder %s18, 3
      %p167 = por %p165, %p166
      %p168 = scmp.ne.s32.totalorder %s157, %s158
      %p169 = scmp.eq.s32.totalorder %s18, 0
      %p170 = por %p168, %p169
      %p171 = scmp.ne.s32.totalorder %s157, %s158
      %p172 = scmp.eq.s32.totalorder %s19, 3
      %p173 = por %p171, %p172
      %p175 = scmp.ne.s32.totalorder %s158, %s174
      %p176 = scmp.eq.s32.totalorder %s19, 0
      %p177 = por %p175, %p176
      %s178 = ssub.s32 %s20, %s39
      %s179 = ssub.s32 %s21, %s35
      %s180 = sor.u32 %s178, %s179
      %p181 = scmp.eq.s32.totalorder %s180, 0
      %s183 = sadd.s32 %s182, 1
      %s184 = scalar_select %p181, %s182, %s183
      %p187 = pneg %p181
      %p188 = scmp.eq.s32.totalorder %s13, 3
      %p189 = por %p187, %p188
      %p190 = scmp.ne.s32.totalorder %s182, %s185
      %p191 = scmp.eq.s32.totalorder %s13, 0
      %p192 = por %p190, %p191
      %p193 = scmp.ne.s32.totalorder %s182, %s185
      %p194 = scmp.eq.s32.totalorder %s18, 3
      %p195 = por %p193, %p194
      %p196 = scmp.ne.s32.totalorder %s185, %s186
      %p197 = scmp.eq.s32.totalorder %s18, 0
      %p198 = por %p196, %p197
      %p199 = scmp.ne.s32.totalorder %s185, %s186
      %p200 = scmp.eq.s32.totalorder %s19, 3
      %p201 = por %p199, %p200
      %p203 = scmp.ne.s32.totalorder %s186, %s202
      %p204 = scmp.eq.s32.totalorder %s19, 0
      %p205 = por %p203, %p204
      %p206 = scmp.le.s32.totalorder 1, %s13
      %p207 = scmp.lt.s32.totalorder %s13, 5
      %p208 = pnand %p206, %p207
      %p209 = pneg %p208
      // Predicated region
      $region9: #{_lambda_.2} parent=5 // pred_check
        _
      $region10: #{_lambda_.2} parent=5 // pred_check_branch
        %211 = sbr.rel (%p208) target = $region12
      $region11: #{_lambda_.2} parent=5 // pred_region
        %s212 = ssub.s32 %s13, 1
        // Predicated region
        $region13: #{_lambda_.2} parent=11 // pred_check
          %p213 = pneg %p88
        $region14: #{_lambda_.2} parent=11 // pred_check_branch
          %215 = sbr.rel (%p213) target = $region16
        $region15: #{_lambda_.2} parent=11 // pred_region
          %s216 = smul.u32 4, %s25
          %s218 = ssub.s32 256, 256
          %219 = vsyncadd [#allocation4], %s218
          %s220 = sadd.s32 %s24, %s216
          %s221 = smul.addr %s220, 64
          %s222 = scalar_lea.hbm %s1, %s221
          %s223 = sshll.u32 [#allocation3], 4
          %s224 = int_to_ptr.vmem [resolvable:$true] %s223
          %229 = dma.hbm_to_vmem [thread:$0]  %s222, 256, %s224, [#allocation4], 64, 64, 4
        $region16: #{_lambda_.2} parent=11 // pred_fallthru
          _
        // Predicated region
        $region17: #{_lambda_.2} parent=11 // pred_check
          %p230 = pneg %p114
        $region18: #{_lambda_.2} parent=11 // pred_check_branch
          %232 = sbr.rel (%p230) target = $region20
        $region19: #{_lambda_.2} parent=11 // pred_region
          %p233 = scmp.lt.s32.totalorder %s24, 0
          %s234 = scalar_select %p233, %s24, 0
          %s235 = scalar_lea.vmem %s2, %s234
        $region20: #{_lambda_.2} parent=11 // pred_fallthru
          _
      $region12: #{_lambda_.2} parent=5 // pred_fallthru
        _
      %p236 = scmp.lt.s32.totalorder %s13, 4
      // Predicated region
      $region21: #{_lambda_.2} parent=5 // pred_check
        %p237 = pneg %p236
      $region22: #{_lambda_.2} parent=5 // pred_check_branch
        %239 = sbr.rel (%p237) target = $region24
      $region23: #{_lambda_.2} parent=5 // pred_region
        // Predicated region
        $region25: #{_lambda_.2} parent=23 // pred_check
          %p240 = pneg %p54
        $region26: #{_lambda_.2} parent=23 // pred_check_branch
          %242 = sbr.rel (%p240) target = $region28
        $region27: #{_lambda_.2} parent=23 // pred_region
          %s243 = smul.u32 64, %s20
          %p244 = scmp.lt.s32.totalorder %s243, 255
          %s245 = scalar_select %p244, %s243, 255
          %p246 = scmp.lt.s32.totalorder %s22, 0
          %s247 = scalar_select %p246, %s22, 0
          %s248 = sadd.s32 %s247, %s245
          %s249 = smul.addr %s248, 4
          %s250 = scalar_lea.vmem %s0, %s249
          %s251 = smul.u32 64, %s20
        $region28: #{_lambda_.2} parent=23 // pred_fallthru
          _
      $region24: #{_lambda_.2} parent=5 // pred_fallthru
        _
      %p252 = scmp.le.s32.totalorder 1, %s13
      %p253 = scmp.lt.s32.totalorder %s13, 5
      %p254 = pnand %p252, %p253
      %p255 = pneg %p254
      // Predicated region
      $region29: #{_lambda_.2} parent=5 // pred_check
        _
      $region30: #{_lambda_.2} parent=5 // pred_check_branch
        %257 = sbr.rel (%p254) target = $region32
      $region31: #{_lambda_.2} parent=5 // pred_region
        %s258 = ssub.s32 %s13, 1
        // Predicated region
        $region33: #{_lambda_.2} parent=31 // pred_check
          %p259 = pneg %p88
        $region34: #{_lambda_.2} parent=31 // pred_check_branch
          %261 = sbr.rel (%p259) target = $region36
        $region35: #{_lambda_.2} parent=31 // pred_region
          %262 = dma.done [#allocation4], 256
        $region36: #{_lambda_.2} parent=31 // pred_fallthru
          _
        %s263 = smul.u32 64, %s23
        %p264 = scmp.lt.s32.totalorder %s263, 255
        %s265 = scalar_select %p264, %s263, 255
        %p266 = scmp.lt.s32.totalorder %s25, 0
        %s267 = scalar_select %p266, %s25, 0
        %s268 = sadd.s32 %s267, %s265
        %s269 = smul.addr %s268, 4
        %s270 = scalar_lea.vmem %s0, %s269
        %p271 = pneg %p60
        %p272 = pneg %p57
        %p273 = pneg %p88
        %p274 = pneg %p85
        %p275 = scmp.lt.s32.totalorder %s24, 0
        %s276 = scalar_select %p275, %s24, 0
        %s277 = scalar_lea.vmem %s2, %s276
        %p278 = pneg %p114
        %p279 = pneg %p111
        %p280 = pneg %p142
        %p281 = pneg %p139
        %s282 = smul.u32 64, %s23
        %p283 = scmp.lt.s32.totalorder %s282, 255
        %s284 = scalar_select %p283, %s282, 255
        %p285 = scmp.lt.s32.totalorder %s24, 0
        %s286 = scalar_select %p285, %s24, 0
        %s287 = sadd.s32 %s286, %s284
        %s288 = smul.addr %s287, 8
        %s289 = scalar_lea.vmem %s3, %s288
        %p290 = pneg %p170
        %p291 = pneg %p167
        %p292 = scmp.lt.s32.totalorder %s23, 3
        %s293 = scalar_select %p292, %s23, 3
        %p294 = scmp.lt.s32.totalorder %s24, 0
        %s295 = scalar_select %p294, %s24, 0
        %s296 = sadd.s32 %s295, %s293
        %s297 = scalar_lea.vmem %s4, %s296
        %p298 = pneg %p198
        %p299 = pneg %p195
        %p300 = scmp.lt.s32.totalorder %s23, 3
        %s301 = scalar_select %p300, %s23, 3
        %p302 = scmp.lt.s32.totalorder %s24, 0
        %s303 = scalar_select %p302, %s24, 0
        %s304 = sadd.s32 %s303, %s301
        %s305 = scalar_lea.vmem %s5, %s304
        %s306 = smul.u32 64, %s23
        %p307 = scmp.lt.s32.totalorder %s306, 255
        %s308 = scalar_select %p307, %s306, 255
        %p309 = scmp.lt.s32.totalorder %s25, 0
        %s310 = scalar_select %p309, %s25, 0
        %s311 = sadd.s32 %s310, %s308
        %s312 = smul.addr %s311, 4
        %s313 = scalar_lea.vmem %s0, %s312
        %s314 = smul.u32 64, %s23
        %s315 = smul.u32 4, %s25
        %p316 = scmp.lt.s32.totalorder %s24, 0
        %s317 = scalar_select %p316, %s24, 0
        %s318 = scalar_lea.vmem %s2, %s317
        %s319 = smul.u32 64, %s23
        %p320 = scmp.lt.s32.totalorder %s319, 255
        %s321 = scalar_select %p320, %s319, 255
        %p322 = scmp.lt.s32.totalorder %s24, 0
        %s323 = scalar_select %p322, %s24, 0
        %s324 = sadd.s32 %s323, %s321
        %s325 = smul.addr %s324, 8
        %s326 = scalar_lea.vmem %s3, %s325
        %s327 = smul.u32 64, %s23
        %p328 = scmp.lt.s32.totalorder %s23, 3
        %s329 = scalar_select %p328, %s23, 3
        %p330 = scmp.lt.s32.totalorder %s24, 0
        %s331 = scalar_select %p330, %s24, 0
        %s332 = sadd.s32 %s331, %s329
        %s333 = scalar_lea.vmem %s4, %s332
        %p334 = scmp.lt.s32.totalorder %s23, 3
        %s335 = scalar_select %p334, %s23, 3
        %p336 = scmp.lt.s32.totalorder %s24, 0
        %s337 = scalar_select %p336, %s24, 0
        %s338 = sadd.s32 %s337, %s335
        %s339 = scalar_lea.vmem %s5, %s338
        %p341 = scmp.eq.s32.totalorder %s25, 0
        // Predicated region
        $region37: #{_lambda_.2} parent=31 // pred_check
          %p342 = pneg %p341
        $region38: #{_lambda_.2} parent=31 // pred_check_branch
          %344 = sbr.rel (%p342) target = $region40
        $region39: #{_lambda_.2} parent=31 // pred_region
          %345 = vst [vmem:[#allocation2] sm:$0xff] 0.0
          %346 = vst [vmem:[#allocation2 + $0x8] sm:$0xff] 0.0
          %347 = vst [vmem:[#allocation2 + $0x10] sm:$0xff] 0.0
          %348 = vst [vmem:[#allocation2 + $0x18] sm:$0xff] 0.0
          %349 = vst [vmem:[#allocation2 + $0x20] sm:$0xff] 0.0
          %350 = vst [vmem:[#allocation2 + $0x28] sm:$0xff] 0.0
          %351 = vst [vmem:[#allocation2 + $0x30] sm:$0xff] 0.0
          %352 = vst [vmem:[#allocation2 + $0x38] sm:$0xff] 0.0
          %353 = vst [vmem:[#allocation2 + $0x40] sm:$0xff] 0.0
          %354 = vst [vmem:[#allocation2 + $0x48] sm:$0xff] 0.0
          %355 = vst [vmem:[#allocation2 + $0x50] sm:$0xff] 0.0
          %356 = vst [vmem:[#allocation2 + $0x58] sm:$0xff] 0.0
          %357 = vst [vmem:[#allocation2 + $0x60] sm:$0xff] 0.0
          %358 = vst [vmem:[#allocation2 + $0x68] sm:$0xff] 0.0
          %359 = vst [vmem:[#allocation2 + $0x70] sm:$0xff] 0.0
          %360 = vst [vmem:[#allocation2 + $0x78] sm:$0xff] 0.0
          %361 = vst [vmem:[#allocation2 + $0x80] sm:$0xff] 0.0
          %362 = vst [vmem:[#allocation2 + $0x88] sm:$0xff] 0.0
          %363 = vst [vmem:[#allocation2 + $0x90] sm:$0xff] 0.0
          %364 = vst [vmem:[#allocation2 + $0x98] sm:$0xff] 0.0
          %365 = vst [vmem:[#allocation2 + $0xa0] sm:$0xff] 0.0
          %366 = vst [vmem:[#allocation2 + $0xa8] sm:$0xff] 0.0
          %367 = vst [vmem:[#allocation2 + $0xb0] sm:$0xff] 0.0
          %368 = vst [vmem:[#allocation2 + $0xb8] sm:$0xff] 0.0
          %369 = vst [vmem:[#allocation2 + $0xc0] sm:$0xff] 0.0
          %370 = vst [vmem:[#allocation2 + $0xc8] sm:$0xff] 0.0
          %371 = vst [vmem:[#allocation2 + $0xd0] sm:$0xff] 0.0
          %372 = vst [vmem:[#allocation2 + $0xd8] sm:$0xff] 0.0
          %373 = vst [vmem:[#allocation2 + $0xe0] sm:$0xff] 0.0
          %374 = vst [vmem:[#allocation2 + $0xe8] sm:$0xff] 0.0
          %375 = vst [vmem:[#allocation2 + $0xf0] sm:$0xff] 0.0
          %376 = vst [vmem:[#allocation2 + $0xf8] sm:$0xff] 0.0
          %377 = vst [vmem:[#allocation2 + $0x100] sm:$0xff] 0.0
          %378 = vst [vmem:[#allocation2 + $0x108] sm:$0xff] 0.0
          %379 = vst [vmem:[#allocation2 + $0x110] sm:$0xff] 0.0
          %380 = vst [vmem:[#allocation2 + $0x118] sm:$0xff] 0.0
          %381 = vst [vmem:[#allocation2 + $0x120] sm:$0xff] 0.0
          %382 = vst [vmem:[#allocation2 + $0x128] sm:$0xff] 0.0
          %383 = vst [vmem:[#allocation2 + $0x130] sm:$0xff] 0.0
          %384 = vst [vmem:[#allocation2 + $0x138] sm:$0xff] 0.0
          %385 = vst [vmem:[#allocation2 + $0x140] sm:$0xff] 0.0
          %386 = vst [vmem:[#allocation2 + $0x148] sm:$0xff] 0.0
          %387 = vst [vmem:[#allocation2 + $0x150] sm:$0xff] 0.0
          %388 = vst [vmem:[#allocation2 + $0x158] sm:$0xff] 0.0
          %389 = vst [vmem:[#allocation2 + $0x160] sm:$0xff] 0.0
          %390 = vst [vmem:[#allocation2 + $0x168] sm:$0xff] 0.0
          %391 = vst [vmem:[#allocation2 + $0x170] sm:$0xff] 0.0
          %392 = vst [vmem:[#allocation2 + $0x178] sm:$0xff] 0.0
          %393 = vst [vmem:[#allocation2 + $0x180] sm:$0xff] 0.0
          %394 = vst [vmem:[#allocation2 + $0x188] sm:$0xff] 0.0
          %395 = vst [vmem:[#allocation2 + $0x190] sm:$0xff] 0.0
          %396 = vst [vmem:[#allocation2 + $0x198] sm:$0xff] 0.0
          %397 = vst [vmem:[#allocation2 + $0x1a0] sm:$0xff] 0.0
          %398 = vst [vmem:[#allocation2 + $0x1a8] sm:$0xff] 0.0
          %399 = vst [vmem:[#allocation2 + $0x1b0] sm:$0xff] 0.0
          %400 = vst [vmem:[#allocation2 + $0x1b8] sm:$0xff] 0.0
          %401 = vst [vmem:[#allocation2 + $0x1c0] sm:$0xff] 0.0
          %402 = vst [vmem:[#allocation2 + $0x1c8] sm:$0xff] 0.0
          %403 = vst [vmem:[#allocation2 + $0x1d0] sm:$0xff] 0.0
          %404 = vst [vmem:[#allocation2 + $0x1d8] sm:$0xff] 0.0
          %405 = vst [vmem:[#allocation2 + $0x1e0] sm:$0xff] 0.0
          %406 = vst [vmem:[#allocation2 + $0x1e8] sm:$0xff] 0.0
          %407 = vst [vmem:[#allocation2 + $0x1f0] sm:$0xff] 0.0
          %408 = vst [vmem:[#allocation2 + $0x1f8] sm:$0xff] 0.0
        $region40: #{_lambda_.2} parent=31 // pred_fallthru
          _
        %v409 = vld [vmem:[#allocation2] sm:$0xff]
        %v410 = vld [vmem:[#allocation2 + $0x8] sm:$0xff]
        %v411 = vld [vmem:[#allocation2 + $0x10] sm:$0xff]
        %v412 = vld [vmem:[#allocation2 + $0x18] sm:$0xff]
        %v413 = vld [vmem:[#allocation2 + $0x20] sm:$0xff]
        %v414 = vld [vmem:[#allocation2 + $0x28] sm:$0xff]
        %v415 = vld [vmem:[#allocation2 + $0x30] sm:$0xff]
        %v416 = vld [vmem:[#allocation2 + $0x38] sm:$0xff]
        %v417 = vld [vmem:[#allocation2 + $0x40] sm:$0xff]
        %v418 = vld [vmem:[#allocation2 + $0x48] sm:$0xff]
        %v419 = vld [vmem:[#allocation2 + $0x50] sm:$0xff]
        %v420 = vld [vmem:[#allocation2 + $0x58] sm:$0xff]
        %v421 = vld [vmem:[#allocation2 + $0x60] sm:$0xff]
        %v422 = vld [vmem:[#allocation2 + $0x68] sm:$0xff]
        %v423 = vld [vmem:[#allocation2 + $0x70] sm:$0xff]
        %v424 = vld [vmem:[#allocation2 + $0x78] sm:$0xff]
        %v425 = vld [vmem:[#allocation2 + $0x80] sm:$0xff]
        %v426 = vld [vmem:[#allocation2 + $0x88] sm:$0xff]
        %v427 = vld [vmem:[#allocation2 + $0x90] sm:$0xff]
        %v428 = vld [vmem:[#allocation2 + $0x98] sm:$0xff]
        %v429 = vld [vmem:[#allocation2 + $0xa0] sm:$0xff]
        %v430 = vld [vmem:[#allocation2 + $0xa8] sm:$0xff]
        %v431 = vld [vmem:[#allocation2 + $0xb0] sm:$0xff]
        %v432 = vld [vmem:[#allocation2 + $0xb8] sm:$0xff]
        %v433 = vld [vmem:[#allocation2 + $0xc0] sm:$0xff]
        %v434 = vld [vmem:[#allocation2 + $0xc8] sm:$0xff]
        %v435 = vld [vmem:[#allocation2 + $0xd0] sm:$0xff]
        %v436 = vld [vmem:[#allocation2 + $0xd8] sm:$0xff]
        %v437 = vld [vmem:[#allocation2 + $0xe0] sm:$0xff]
        %v438 = vld [vmem:[#allocation2 + $0xe8] sm:$0xff]
        %v439 = vld [vmem:[#allocation2 + $0xf0] sm:$0xff]
        %v440 = vld [vmem:[#allocation2 + $0xf8] sm:$0xff]
        %v441 = vld [vmem:[#allocation2 + $0x100] sm:$0xff]
        %v442 = vld [vmem:[#allocation2 + $0x108] sm:$0xff]
        %v443 = vld [vmem:[#allocation2 + $0x110] sm:$0xff]
        %v444 = vld [vmem:[#allocation2 + $0x118] sm:$0xff]
        %v445 = vld [vmem:[#allocation2 + $0x120] sm:$0xff]
        %v446 = vld [vmem:[#allocation2 + $0x128] sm:$0xff]
        %v447 = vld [vmem:[#allocation2 + $0x130] sm:$0xff]
        %v448 = vld [vmem:[#allocation2 + $0x138] sm:$0xff]
        %v449 = vld [vmem:[#allocation2 + $0x140] sm:$0xff]
        %v450 = vld [vmem:[#allocation2 + $0x148] sm:$0xff]
        %v451 = vld [vmem:[#allocation2 + $0x150] sm:$0xff]
        %v452 = vld [vmem:[#allocation2 + $0x158] sm:$0xff]
        %v453 = vld [vmem:[#allocation2 + $0x160] sm:$0xff]
        %v454 = vld [vmem:[#allocation2 + $0x168] sm:$0xff]
        %v455 = vld [vmem:[#allocation2 + $0x170] sm:$0xff]
        %v456 = vld [vmem:[#allocation2 + $0x178] sm:$0xff]
        %v457 = vld [vmem:[#allocation2 + $0x180] sm:$0xff]
        %v458 = vld [vmem:[#allocation2 + $0x188] sm:$0xff]
        %v459 = vld [vmem:[#allocation2 + $0x190] sm:$0xff]
        %v460 = vld [vmem:[#allocation2 + $0x198] sm:$0xff]
        %v461 = vld [vmem:[#allocation2 + $0x1a0] sm:$0xff]
        %v462 = vld [vmem:[#allocation2 + $0x1a8] sm:$0xff]
        %v463 = vld [vmem:[#allocation2 + $0x1b0] sm:$0xff]
        %v464 = vld [vmem:[#allocation2 + $0x1b8] sm:$0xff]
        %v465 = vld [vmem:[#allocation2 + $0x1c0] sm:$0xff]
        %v466 = vld [vmem:[#allocation2 + $0x1c8] sm:$0xff]
        %v467 = vld [vmem:[#allocation2 + $0x1d0] sm:$0xff]
        %v468 = vld [vmem:[#allocation2 + $0x1d8] sm:$0xff]
        %v469 = vld [vmem:[#allocation2 + $0x1e0] sm:$0xff]
        %v470 = vld [vmem:[#allocation2 + $0x1e8] sm:$0xff]
        %v471 = vld [vmem:[#allocation2 + $0x1f0] sm:$0xff]
        %v472 = vld [vmem:[#allocation2 + $0x1f8] sm:$0xff]
        %v473 = vld [vmem:[%s313] sm:$0xf]
        %v474 = vld [vmem:[%s313 + $0x4] sm:$0xf]
        %v475 = vld [vmem:[%s313 + $0x8] sm:$0xf]
        %v476 = vld [vmem:[%s313 + $0xc] sm:$0xf]
        %v477 = vld [vmem:[%s313 + $0x10] sm:$0xf]
        %v478 = vld [vmem:[%s313 + $0x14] sm:$0xf]
        %v479 = vld [vmem:[%s313 + $0x18] sm:$0xf]
        %v480 = vld [vmem:[%s313 + $0x1c] sm:$0xf]
        %v481 = vld [vmem:[%s313 + $0x20] sm:$0xf]
        %v482 = vld [vmem:[%s313 + $0x24] sm:$0xf]
        %v483 = vld [vmem:[%s313 + $0x28] sm:$0xf]
        %v484 = vld [vmem:[%s313 + $0x2c] sm:$0xf]
        %v485 = vld [vmem:[%s313 + $0x30] sm:$0xf]
        %v486 = vld [vmem:[%s313 + $0x34] sm:$0xf]
        %v487 = vld [vmem:[%s313 + $0x38] sm:$0xf]
        %v488 = vld [vmem:[%s313 + $0x3c] sm:$0xf]
        %v489 = vld [vmem:[%s313 + $0x40] sm:$0xf]
        %v490 = vld [vmem:[%s313 + $0x44] sm:$0xf]
        %v491 = vld [vmem:[%s313 + $0x48] sm:$0xf]
        %v492 = vld [vmem:[%s313 + $0x4c] sm:$0xf]
        %v493 = vld [vmem:[%s313 + $0x50] sm:$0xf]
        %v494 = vld [vmem:[%s313 + $0x54] sm:$0xf]
        %v495 = vld [vmem:[%s313 + $0x58] sm:$0xf]
        %v496 = vld [vmem:[%s313 + $0x5c] sm:$0xf]
        %v497 = vld [vmem:[%s313 + $0x60] sm:$0xf]
        %v498 = vld [vmem:[%s313 + $0x64] sm:$0xf]
        %v499 = vld [vmem:[%s313 + $0x68] sm:$0xf]
        %v500 = vld [vmem:[%s313 + $0x6c] sm:$0xf]
        %v501 = vld [vmem:[%s313 + $0x70] sm:$0xf]
        %v502 = vld [vmem:[%s313 + $0x74] sm:$0xf]
        %v503 = vld [vmem:[%s313 + $0x78] sm:$0xf]
        %v504 = vld [vmem:[%s313 + $0x7c] sm:$0xf]
        %v505 = vld [vmem:[%s313 + $0x80] sm:$0xf]
        %v506 = vld [vmem:[%s313 + $0x84] sm:$0xf]
        %v507 = vld [vmem:[%s313 + $0x88] sm:$0xf]
        %v508 = vld [vmem:[%s313 + $0x8c] sm:$0xf]
        %v509 = vld [vmem:[%s313 + $0x90] sm:$0xf]
        %v510 = vld [vmem:[%s313 + $0x94] sm:$0xf]
        %v511 = vld [vmem:[%s313 + $0x98] sm:$0xf]
        %v512 = vld [vmem:[%s313 + $0x9c] sm:$0xf]
        %v513 = vld [vmem:[%s313 + $0xa0] sm:$0xf]
        %v514 = vld [vmem:[%s313 + $0xa4] sm:$0xf]
        %v515 = vld [vmem:[%s313 + $0xa8] sm:$0xf]
        %v516 = vld [vmem:[%s313 + $0xac] sm:$0xf]
        %v517 = vld [vmem:[%s313 + $0xb0] sm:$0xf]
        %v518 = vld [vmem:[%s313 + $0xb4] sm:$0xf]
        %v519 = vld [vmem:[%s313 + $0xb8] sm:$0xf]
        %v520 = vld [vmem:[%s313 + $0xbc] sm:$0xf]
        %v521 = vld [vmem:[%s313 + $0xc0] sm:$0xf]
        %v522 = vld [vmem:[%s313 + $0xc4] sm:$0xf]
        %v523 = vld [vmem:[%s313 + $0xc8] sm:$0xf]
        %v524 = vld [vmem:[%s313 + $0xcc] sm:$0xf]
        %v525 = vld [vmem:[%s313 + $0xd0] sm:$0xf]
        %v526 = vld [vmem:[%s313 + $0xd4] sm:$0xf]
        %v527 = vld [vmem:[%s313 + $0xd8] sm:$0xf]
        %v528 = vld [vmem:[%s313 + $0xdc] sm:$0xf]
        %v529 = vld [vmem:[%s313 + $0xe0] sm:$0xf]
        %v530 = vld [vmem:[%s313 + $0xe4] sm:$0xf]
        %v531 = vld [vmem:[%s313 + $0xe8] sm:$0xf]
        %v532 = vld [vmem:[%s313 + $0xec] sm:$0xf]
        %v533 = vld [vmem:[%s313 + $0xf0] sm:$0xf]
        %v534 = vld [vmem:[%s313 + $0xf4] sm:$0xf]
        %v535 = vld [vmem:[%s313 + $0xf8] sm:$0xf]
        %v536 = vld [vmem:[%s313 + $0xfc] sm:$0xf]
        %v537 = vld [vmem:[#allocation3] sm:$0xf]
        %v538 = vld [vmem:[#allocation3 + $0x4] sm:$0xf]
        %v539 = vld [vmem:[#allocation3 + $0x8] sm:$0xf]
        %v540 = vld [vmem:[#allocation3 + $0xc] sm:$0xf]
        %v605 = vunpack.c.l.b16 %v473
        %v606 = vunpack.c.l.b16 %v474
        %v607 = vunpack.c.l.b16 %v475
        %v608 = vunpack.c.l.b16 %v476
        %v609 = vunpack.c.l.b16 %v477
        %v610 = vunpack.c.l.b16 %v478
        %v611 = vunpack.c.l.b16 %v479
        %v612 = vunpack.c.l.b16 %v480
        %v613 = vunpack.c.l.b16 %v481
        %v614 = vunpack.c.l.b16 %v482
        %v615 = vunpack.c.l.b16 %v483
        %v616 = vunpack.c.l.b16 %v484
        %v617 = vunpack.c.l.b16 %v485
        %v618 = vunpack.c.l.b16 %v486
        %v619 = vunpack.c.l.b16 %v487
        %v620 = vunpack.c.l.b16 %v488
        %v621 = vunpack.c.l.b16 %v489
        %v622 = vunpack.c.l.b16 %v490
        %v623 = vunpack.c.l.b16 %v491
        %v624 = vunpack.c.l.b16 %v492
        %v625 = vunpack.c.l.b16 %v493
        %v626 = vunpack.c.l.b16 %v494
        %v627 = vunpack.c.l.b16 %v495
        %v628 = vunpack.c.l.b16 %v496
        %v629 = vunpack.c.l.b16 %v497
        %v630 = vunpack.c.l.b16 %v498
        %v631 = vunpack.c.l.b16 %v499
        %v632 = vunpack.c.l.b16 %v500
        %v633 = vunpack.c.l.b16 %v501
        %v634 = vunpack.c.l.b16 %v502
        %v635 = vunpack.c.l.b16 %v503
        %v636 = vunpack.c.l.b16 %v504
        %v637 = vunpack.c.l.b16 %v505
        %v638 = vunpack.c.l.b16 %v506
        %v639 = vunpack.c.l.b16 %v507
        %v640 = vunpack.c.l.b16 %v508
        %v641 = vunpack.c.l.b16 %v509
        %v642 = vunpack.c.l.b16 %v510
        %v643 = vunpack.c.l.b16 %v511
        %v644 = vunpack.c.l.b16 %v512
        %v645 = vunpack.c.l.b16 %v513
        %v646 = vunpack.c.l.b16 %v514
        %v647 = vunpack.c.l.b16 %v515
        %v648 = vunpack.c.l.b16 %v516
        %v649 = vunpack.c.l.b16 %v517
        %v650 = vunpack.c.l.b16 %v518
        %v651 = vunpack.c.l.b16 %v519
        %v652 = vunpack.c.l.b16 %v520
        %v653 = vunpack.c.l.b16 %v521
        %v654 = vunpack.c.l.b16 %v522
        %v655 = vunpack.c.l.b16 %v523
        %v656 = vunpack.c.l.b16 %v524
        %v657 = vunpack.c.l.b16 %v525
        %v658 = vunpack.c.l.b16 %v526
        %v659 = vunpack.c.l.b16 %v527
        %v660 = vunpack.c.l.b16 %v528
        %v661 = vunpack.c.l.b16 %v529
        %v662 = vunpack.c.l.b16 %v530
        %v663 = vunpack.c.l.b16 %v531
        %v664 = vunpack.c.l.b16 %v532
        %v665 = vunpack.c.l.b16 %v533
        %v666 = vunpack.c.l.b16 %v534
        %v667 = vunpack.c.l.b16 %v535
        %v668 = vunpack.c.l.b16 %v536
        %v669 = vpack.c.b16 %v606, %v605
        %v670 = vpack.c.b16 %v608, %v607
        %v671 = vpack.c.b16 %v610, %v609
        %v672 = vpack.c.b16 %v612, %v611
        %v673 = vpack.c.b16 %v614, %v613
        %v674 = vpack.c.b16 %v616, %v615
        %v675 = vpack.c.b16 %v618, %v617
        %v676 = vpack.c.b16 %v620, %v619
        %v677 = vpack.c.b16 %v622, %v621
        %v678 = vpack.c.b16 %v624, %v623
        %v679 = vpack.c.b16 %v626, %v625
        %v680 = vpack.c.b16 %v628, %v627
        %v681 = vpack.c.b16 %v630, %v629
        %v682 = vpack.c.b16 %v632, %v631
        %v683 = vpack.c.b16 %v634, %v633
        %v684 = vpack.c.b16 %v636, %v635
        %v685 = vpack.c.b16 %v638, %v637
        %v686 = vpack.c.b16 %v640, %v639
        %v687 = vpack.c.b16 %v642, %v641
        %v688 = vpack.c.b16 %v644, %v643
        %v689 = vpack.c.b16 %v646, %v645
        %v690 = vpack.c.b16 %v648, %v647
        %v691 = vpack.c.b16 %v650, %v649
        %v692 = vpack.c.b16 %v652, %v651
        %v693 = vpack.c.b16 %v654, %v653
        %v694 = vpack.c.b16 %v656, %v655
        %v695 = vpack.c.b16 %v658, %v657
        %v696 = vpack.c.b16 %v660, %v659
        %v697 = vpack.c.b16 %v662, %v661
        %v698 = vpack.c.b16 %v664, %v663
        %v699 = vpack.c.b16 %v666, %v665
        %v700 = vpack.c.b16 %v668, %v667
        %v705 = vunpack.c.l.b16 %v537
        %v706 = vunpack.c.l.b16 %v538
        %v707 = vunpack.c.l.b16 %v539
        %v708 = vunpack.c.l.b16 %v540
        %v709 = vpack.c.b16 %v706, %v705
        %v710 = vpack.c.b16 %v708, %v707
        %vm713 = vcmask 261120
        %v715 = vsel %vm713, %v669, 0
        %v718 = vsel %vm713, %v670, 0
        %v721 = vsel %vm713, %v671, 0
        %v724 = vsel %vm713, %v672, 0
        %v727 = vsel %vm713, %v673, 0
        %v730 = vsel %vm713, %v674, 0
        %v733 = vsel %vm713, %v675, 0
        %v736 = vsel %vm713, %v676, 0
        %v739 = vsel %vm713, %v677, 0
        %v742 = vsel %vm713, %v678, 0
        %v745 = vsel %vm713, %v679, 0
        %v748 = vsel %vm713, %v680, 0
        %v751 = vsel %vm713, %v681, 0
        %v754 = vsel %vm713, %v682, 0
        %v757 = vsel %vm713, %v683, 0
        %v760 = vsel %vm713, %v684, 0
        %v763 = vsel %vm713, %v685, 0
        %v766 = vsel %vm713, %v686, 0
        %v769 = vsel %vm713, %v687, 0
        %v772 = vsel %vm713, %v688, 0
        %v775 = vsel %vm713, %v689, 0
        %v778 = vsel %vm713, %v690, 0
        %v781 = vsel %vm713, %v691, 0
        %v784 = vsel %vm713, %v692, 0
        %v787 = vsel %vm713, %v693, 0
        %v790 = vsel %vm713, %v694, 0
        %v793 = vsel %vm713, %v695, 0
        %v796 = vsel %vm713, %v696, 0
        %v799 = vsel %vm713, %v697, 0
        %v802 = vsel %vm713, %v698, 0
        %v805 = vsel %vm713, %v699, 0
        %v808 = vsel %vm713, %v700, 0
        %810 = vmatprep.subr.bf16.mxu0 0
        %811 = vmatpush1.bf16.msra.mxu0 0
        %812 = vmatprep.subr.bf16.mxu0 0
        %813 = vmatpush1.bf16.msra.mxu0 0
        %814 = vmatprep.subr.bf16.mxu0 0
        %815 = vmatpush1.bf16.msra.mxu0 0
        %816 = vmatprep.subr.bf16.mxu0 0
        %817 = vmatpush1.bf16.msra.mxu0 0
        %818 = vmatprep.subr.bf16.mxu0 0
        %819 = vmatpush1.bf16.msra.mxu0 0
        %820 = vmatprep.subr.bf16.mxu0 0
        %821 = vmatpush1.bf16.msra.mxu0 0
        %822 = vmatprep.subr.bf16.mxu0 0
        %823 = vmatpush1.bf16.msra.mxu0 %v710
        %824 = vmatprep.subr.bf16.mxu0 0
        %825 = vmatpush1.bf16.msra.mxu0 %v709
        %826 = vmatprep.subr.bf16.mxu0 0
        %827 = vmatpush2.bf16.msra.mxu0 0
        %828 = vmatprep.subr.bf16.mxu0 0
        %829 = vmatpush2.bf16.msra.mxu0 0
        %830 = vmatprep.subr.bf16.mxu0 0
        %831 = vmatpush2.bf16.msra.mxu0 0
        %832 = vmatprep.subr.bf16.mxu0 0
        %833 = vmatpush2.bf16.msra.mxu0 0
        %834 = vmatprep.subr.bf16.mxu0 0
        %835 = vmatpush2.bf16.msra.mxu0 0
        %836 = vmatprep.subr.bf16.mxu0 0
        %837 = vmatpush2.bf16.msra.mxu0 0
        %838 = vmatprep.subr.bf16.mxu0 0
        %839 = vmatpush2.bf16.msra.mxu0 0
        %840 = vmatprep.subr.bf16.mxu0 0
        %841 = vmatpush2.bf16.msra.mxu0 0
        %842 = vmatprep.mubr.bf16.mxu0 0
        %843 = vmatmul.mubr.bf16.gmra.mxu0 %v715
        %v844 = vpop.f32.mrf.mxu0
        %v845 = vadd.f32 0.0, %v844
        %v846 = vpop.f32.mrf.mxu0
        %v847 = vpop.f32.mrf.mxu0
        %v848 = vadd.f32 0.0, %v847
        %v849 = vpop.f32.mrf.mxu0
        %850 = vmatprep.mubr.bf16.mxu0 0
        %851 = vmatmul.mubr.bf16.gmra.mxu0 %v718
        %v852 = vpop.f32.mrf.mxu0
        %v853 = vadd.f32 0.0, %v852
        %v854 = vpop.f32.mrf.mxu0
        %v855 = vpop.f32.mrf.mxu0
        %v856 = vadd.f32 0.0, %v855
        %v857 = vpop.f32.mrf.mxu0
        %858 = vmatprep.mubr.bf16.mxu0 0
        %859 = vmatmul.mubr.bf16.gmra.mxu0 %v721
        %v860 = vpop.f32.mrf.mxu0
        %v861 = vadd.f32 0.0, %v860
        %v862 = vpop.f32.mrf.mxu0
        %v863 = vpop.f32.mrf.mxu0
        %v864 = vadd.f32 0.0, %v863
        %v865 = vpop.f32.mrf.mxu0
        %866 = vmatprep.mubr.bf16.mxu0 0
        %867 = vmatmul.mubr.bf16.gmra.mxu0 %v724
        %v868 = vpop.f32.mrf.mxu0
        %v869 = vadd.f32 0.0, %v868
        %v870 = vpop.f32.mrf.mxu0
        %v871 = vpop.f32.mrf.mxu0
        %v872 = vadd.f32 0.0, %v871
        %v873 = vpop.f32.mrf.mxu0
        %874 = vmatprep.mubr.bf16.mxu0 0
        %875 = vmatmul.mubr.bf16.gmra.mxu0 %v727
        %v876 = vpop.f32.mrf.mxu0
        %v877 = vadd.f32 0.0, %v876
        %v878 = vpop.f32.mrf.mxu0
        %v879 = vpop.f32.mrf.mxu0
        %v880 = vadd.f32 0.0, %v879
        %v881 = vpop.f32.mrf.mxu0
        %882 = vmatprep.mubr.bf16.mxu0 0
        %883 = vmatmul.mubr.bf16.gmra.mxu0 %v730
        %v884 = vpop.f32.mrf.mxu0
        %v885 = vadd.f32 0.0, %v884
        %v886 = vpop.f32.mrf.mxu0
        %v887 = vpop.f32.mrf.mxu0
        %v888 = vadd.f32 0.0, %v887
        %v889 = vpop.f32.mrf.mxu0
        %890 = vmatprep.mubr.bf16.mxu0 0
        %891 = vmatmul.mubr.bf16.gmra.mxu0 %v733
        %v892 = vpop.f32.mrf.mxu0
        %v893 = vadd.f32 0.0, %v892
        %v894 = vpop.f32.mrf.mxu0
        %v895 = vpop.f32.mrf.mxu0
        %v896 = vadd.f32 0.0, %v895
        %v897 = vpop.f32.mrf.mxu0
        %898 = vmatprep.mubr.bf16.mxu0 0
        %899 = vmatmul.mubr.bf16.gmra.mxu0 %v736
        %v900 = vpop.f32.mrf.mxu0
        %v901 = vadd.f32 0.0, %v900
        %v902 = vpop.f32.mrf.mxu0
        %v903 = vpop.f32.mrf.mxu0
        %v904 = vadd.f32 0.0, %v903
        %v905 = vpop.f32.mrf.mxu0
        %906 = vmatprep.mubr.bf16.mxu0 0
        %907 = vmatmul.mubr.bf16.gmra.mxu0 %v739
        %v908 = vpop.f32.mrf.mxu0
        %v909 = vadd.f32 0.0, %v908
        %v910 = vpop.f32.mrf.mxu0
        %v911 = vpop.f32.mrf.mxu0
        %v912 = vadd.f32 0.0, %v911
        %v913 = vpop.f32.mrf.mxu0
        %914 = vmatprep.mubr.bf16.mxu0 0
        %915 = vmatmul.mubr.bf16.gmra.mxu0 %v742
        %v916 = vpop.f32.mrf.mxu0
        %v917 = vadd.f32 0.0, %v916
        %v918 = vpop.f32.mrf.mxu0
        %v919 = vpop.f32.mrf.mxu0
        %v920 = vadd.f32 0.0, %v919
        %v921 = vpop.f32.mrf.mxu0
        %922 = vmatprep.mubr.bf16.mxu0 0
        %923 = vmatmul.mubr.bf16.gmra.mxu0 %v745
        %v924 = vpop.f32.mrf.mxu0
        %v925 = vadd.f32 0.0, %v924
        %v926 = vpop.f32.mrf.mxu0
        %v927 = vpop.f32.mrf.mxu0
        %v928 = vadd.f32 0.0, %v927
        %v929 = vpop.f32.mrf.mxu0
        %930 = vmatprep.mubr.bf16.mxu0 0
        %931 = vmatmul.mubr.bf16.gmra.mxu0 %v748
        %v932 = vpop.f32.mrf.mxu0
        %v933 = vadd.f32 0.0, %v932
        %v934 = vpop.f32.mrf.mxu0
        %v935 = vpop.f32.mrf.mxu0
        %v936 = vadd.f32 0.0, %v935
        %v937 = vpop.f32.mrf.mxu0
        %938 = vmatprep.mubr.bf16.mxu0 0
        %939 = vmatmul.mubr.bf16.gmra.mxu0 %v751
        %v940 = vpop.f32.mrf.mxu0
        %v941 = vadd.f32 0.0, %v940
        %v942 = vpop.f32.mrf.mxu0
        %v943 = vpop.f32.mrf.mxu0
        %v944 = vadd.f32 0.0, %v943
        %v945 = vpop.f32.mrf.mxu0
        %946 = vmatprep.mubr.bf16.mxu0 0
        %947 = vmatmul.mubr.bf16.gmra.mxu0 %v754
        %v948 = vpop.f32.mrf.mxu0
        %v949 = vadd.f32 0.0, %v948
        %v950 = vpop.f32.mrf.mxu0
        %v951 = vpop.f32.mrf.mxu0
        %v952 = vadd.f32 0.0, %v951
        %v953 = vpop.f32.mrf.mxu0
        %954 = vmatprep.mubr.bf16.mxu0 0
        %955 = vmatmul.mubr.bf16.gmra.mxu0 %v757
        %v956 = vpop.f32.mrf.mxu0
        %v957 = vadd.f32 0.0, %v956
        %v958 = vpop.f32.mrf.mxu0
        %v959 = vpop.f32.mrf.mxu0
        %v960 = vadd.f32 0.0, %v959
        %v961 = vpop.f32.mrf.mxu0
        %962 = vmatprep.mubr.bf16.mxu0 0
        %963 = vmatmul.mubr.bf16.gmra.mxu0 %v760
        %v964 = vpop.f32.mrf.mxu0
        %v965 = vadd.f32 0.0, %v964
        %v966 = vpop.f32.mrf.mxu0
        %v967 = vpop.f32.mrf.mxu0
        %v968 = vadd.f32 0.0, %v967
        %v969 = vpop.f32.mrf.mxu0
        %970 = vmatprep.mubr.bf16.mxu0 0
        %971 = vmatmul.mubr.bf16.gmra.mxu0 %v763
        %v972 = vpop.f32.mrf.mxu0
        %v973 = vadd.f32 0.0, %v972
        %v974 = vpop.f32.mrf.mxu0
        %v975 = vpop.f32.mrf.mxu0
        %v976 = vadd.f32 0.0, %v975
        %v977 = vpop.f32.mrf.mxu0
        %978 = vmatprep.mubr.bf16.mxu0 0
        %979 = vmatmul.mubr.bf16.gmra.mxu0 %v766
        %v980 = vpop.f32.mrf.mxu0
        %v981 = vadd.f32 0.0, %v980
        %v982 = vpop.f32.mrf.mxu0
        %v983 = vpop.f32.mrf.mxu0
        %v984 = vadd.f32 0.0, %v983
        %v985 = vpop.f32.mrf.mxu0
        %986 = vmatprep.mubr.bf16.mxu0 0
        %987 = vmatmul.mubr.bf16.gmra.mxu0 %v769
        %v988 = vpop.f32.mrf.mxu0
        %v989 = vadd.f32 0.0, %v988
        %v990 = vpop.f32.mrf.mxu0
        %v991 = vpop.f32.mrf.mxu0
        %v992 = vadd.f32 0.0, %v991
        %v993 = vpop.f32.mrf.mxu0
        %994 = vmatprep.mubr.bf16.mxu0 0
        %995 = vmatmul.mubr.bf16.gmra.mxu0 %v772
        %v996 = vpop.f32.mrf.mxu0
        %v997 = vadd.f32 0.0, %v996
        %v998 = vpop.f32.mrf.mxu0
        %v999 = vpop.f32.mrf.mxu0
        %v1000 = vadd.f32 0.0, %v999
        %v1001 = vpop.f32.mrf.mxu0
        %1002 = vmatprep.mubr.bf16.mxu0 0
        %1003 = vmatmul.mubr.bf16.gmra.mxu0 %v775
        %v1004 = vpop.f32.mrf.mxu0
        %v1005 = vadd.f32 0.0, %v1004
        %v1006 = vpop.f32.mrf.mxu0
        %v1007 = vpop.f32.mrf.mxu0
        %v1008 = vadd.f32 0.0, %v1007
        %v1009 = vpop.f32.mrf.mxu0
        %1010 = vmatprep.mubr.bf16.mxu0 0
        %1011 = vmatmul.mubr.bf16.gmra.mxu0 %v778
        %v1012 = vpop.f32.mrf.mxu0
        %v1013 = vadd.f32 0.0, %v1012
        %v1014 = vpop.f32.mrf.mxu0
        %v1015 = vpop.f32.mrf.mxu0
        %v1016 = vadd.f32 0.0, %v1015
        %v1017 = vpop.f32.mrf.mxu0
        %1018 = vmatprep.mubr.bf16.mxu0 0
        %1019 = vmatmul.mubr.bf16.gmra.mxu0 %v781
        %v1020 = vpop.f32.mrf.mxu0
        %v1021 = vadd.f32 0.0, %v1020
        %v1022 = vpop.f32.mrf.mxu0
        %v1023 = vpop.f32.mrf.mxu0
        %v1024 = vadd.f32 0.0, %v1023
        %v1025 = vpop.f32.mrf.mxu0
        %1026 = vmatprep.mubr.bf16.mxu0 0
        %1027 = vmatmul.mubr.bf16.gmra.mxu0 %v784
        %v1028 = vpop.f32.mrf.mxu0
        %v1029 = vadd.f32 0.0, %v1028
        %v1030 = vpop.f32.mrf.mxu0
        %v1031 = vpop.f32.mrf.mxu0
        %v1032 = vadd.f32 0.0, %v1031
        %v1033 = vpop.f32.mrf.mxu0
        %1034 = vmatprep.mubr.bf16.mxu0 0
        %1035 = vmatmul.mubr.bf16.gmra.mxu0 %v787
        %v1036 = vpop.f32.mrf.mxu0
        %v1037 = vadd.f32 0.0, %v1036
        %v1038 = vpop.f32.mrf.mxu0
        %v1039 = vpop.f32.mrf.mxu0
        %v1040 = vadd.f32 0.0, %v1039
        %v1041 = vpop.f32.mrf.mxu0
        %1042 = vmatprep.mubr.bf16.mxu0 0
        %1043 = vmatmul.mubr.bf16.gmra.mxu0 %v790
        %v1044 = vpop.f32.mrf.mxu0
        %v1045 = vadd.f32 0.0, %v1044
        %v1046 = vpop.f32.mrf.mxu0
        %v1047 = vpop.f32.mrf.mxu0
        %v1048 = vadd.f32 0.0, %v1047
        %v1049 = vpop.f32.mrf.mxu0
        %1050 = vmatprep.mubr.bf16.mxu0 0
        %1051 = vmatmul.mubr.bf16.gmra.mxu0 %v793
        %v1052 = vpop.f32.mrf.mxu0
        %v1053 = vadd.f32 0.0, %v1052
        %v1054 = vpop.f32.mrf.mxu0
        %v1055 = vpop.f32.mrf.mxu0
        %v1056 = vadd.f32 0.0, %v1055
        %v1057 = vpop.f32.mrf.mxu0
        %1058 = vmatprep.mubr.bf16.mxu0 0
        %1059 = vmatmul.mubr.bf16.gmra.mxu0 %v796
        %v1060 = vpop.f32.mrf.mxu0
        %v1061 = vadd.f32 0.0, %v1060
        %v1062 = vpop.f32.mrf.mxu0
        %v1063 = vpop.f32.mrf.mxu0
        %v1064 = vadd.f32 0.0, %v1063
        %v1065 = vpop.f32.mrf.mxu0
        %1066 = vmatprep.mubr.bf16.mxu0 0
        %1067 = vmatmul.mubr.bf16.gmra.mxu0 %v799
        %v1068 = vpop.f32.mrf.mxu0
        %v1069 = vadd.f32 0.0, %v1068
        %v1070 = vpop.f32.mrf.mxu0
        %v1071 = vpop.f32.mrf.mxu0
        %v1072 = vadd.f32 0.0, %v1071
        %v1073 = vpop.f32.mrf.mxu0
        %1074 = vmatprep.mubr.bf16.mxu0 0
        %1075 = vmatmul.mubr.bf16.gmra.mxu0 %v802
        %v1076 = vpop.f32.mrf.mxu0
        %v1077 = vadd.f32 0.0, %v1076
        %v1078 = vpop.f32.mrf.mxu0
        %v1079 = vpop.f32.mrf.mxu0
        %v1080 = vadd.f32 0.0, %v1079
        %v1081 = vpop.f32.mrf.mxu0
        %1082 = vmatprep.mubr.bf16.mxu0 0
        %1083 = vmatmul.mubr.bf16.gmra.mxu0 %v805
        %v1084 = vpop.f32.mrf.mxu0
        %v1085 = vadd.f32 0.0, %v1084
        %v1086 = vpop.f32.mrf.mxu0
        %v1087 = vpop.f32.mrf.mxu0
        %v1088 = vadd.f32 0.0, %v1087
        %v1089 = vpop.f32.mrf.mxu0
        %1090 = vmatprep.mubr.bf16.mxu0 0
        %1091 = vmatmul.mubr.bf16.gmra.mxu0 %v808
        %v1092 = vpop.f32.mrf.mxu0
        %v1093 = vadd.f32 0.0, %v1092
        %v1094 = vpop.f32.mrf.mxu0
        %v1095 = vpop.f32.mrf.mxu0
        %v1096 = vadd.f32 0.0, %v1095
        %v1097 = vpop.f32.mrf.mxu0
        %1098 = vdwg.mxu0
        %v1099 = vadd.f32 %v409, %v845
        %v1100 = vadd.f32 %v410, %v848
        %v1101 = vadd.f32 %v411, %v853
        %v1102 = vadd.f32 %v412, %v856
        %v1103 = vadd.f32 %v413, %v861
        %v1104 = vadd.f32 %v414, %v864
        %v1105 = vadd.f32 %v415, %v869
        %v1106 = vadd.f32 %v416, %v872
        %v1107 = vadd.f32 %v417, %v877
        %v1108 = vadd.f32 %v418, %v880
        %v1109 = vadd.f32 %v419, %v885
        %v1110 = vadd.f32 %v420, %v888
        %v1111 = vadd.f32 %v421, %v893
        %v1112 = vadd.f32 %v422, %v896
        %v1113 = vadd.f32 %v423, %v901
        %v1114 = vadd.f32 %v424, %v904
        %v1115 = vadd.f32 %v425, %v909
        %v1116 = vadd.f32 %v426, %v912
        %v1117 = vadd.f32 %v427, %v917
        %v1118 = vadd.f32 %v428, %v920
        %v1119 = vadd.f32 %v429, %v925
        %v1120 = vadd.f32 %v430, %v928
        %v1121 = vadd.f32 %v431, %v933
        %v1122 = vadd.f32 %v432, %v936
        %v1123 = vadd.f32 %v433, %v941
        %v1124 = vadd.f32 %v434, %v944
        %v1125 = vadd.f32 %v435, %v949
        %v1126 = vadd.f32 %v436, %v952
        %v1127 = vadd.f32 %v437, %v957
        %v1128 = vadd.f32 %v438, %v960
        %v1129 = vadd.f32 %v439, %v965
        %v1130 = vadd.f32 %v440, %v968
        %v1131 = vadd.f32 %v441, %v973
        %v1132 = vadd.f32 %v442, %v976
        %v1133 = vadd.f32 %v443, %v981
        %v1134 = vadd.f32 %v444, %v984
        %v1135 = vadd.f32 %v445, %v989
        %v1136 = vadd.f32 %v446, %v992
        %v1137 = vadd.f32 %v447, %v997
        %v1138 = vadd.f32 %v448, %v1000
        %v1139 = vadd.f32 %v449, %v1005
        %v1140 = vadd.f32 %v450, %v1008
        %v1141 = vadd.f32 %v451, %v1013
        %v1142 = vadd.f32 %v452, %v1016
        %v1143 = vadd.f32 %v453, %v1021
        %v1144 = vadd.f32 %v454, %v1024
        %v1145 = vadd.f32 %v455, %v1029
        %v1146 = vadd.f32 %v456, %v1032
        %v1147 = vadd.f32 %v457, %v1037
        %v1148 = vadd.f32 %v458, %v1040
        %v1149 = vadd.f32 %v459, %v1045
        %v1150 = vadd.f32 %v460, %v1048
        %v1151 = vadd.f32 %v461, %v1053
        %v1152 = vadd.f32 %v462, %v1056
        %v1153 = vadd.f32 %v463, %v1061
        %v1154 = vadd.f32 %v464, %v1064
        %v1155 = vadd.f32 %v465, %v1069
        %v1156 = vadd.f32 %v466, %v1072
        %v1157 = vadd.f32 %v467, %v1077
        %v1158 = vadd.f32 %v468, %v1080
        %v1159 = vadd.f32 %v469, %v1085
        %v1160 = vadd.f32 %v470, %v1088
        %v1161 = vadd.f32 %v471, %v1093
        %v1162 = vadd.f32 %v472, %v1096
        %1163 = vst [vmem:[#allocation2] sm:$0xff] %v1099
        %1164 = vst [vmem:[#allocation2 + $0x8] sm:$0xff] %v1100
        %1165 = vst [vmem:[#allocation2 + $0x10] sm:$0xff] %v1101
        %1166 = vst [vmem:[#allocation2 + $0x18] sm:$0xff] %v1102
        %1167 = vst [vmem:[#allocation2 + $0x20] sm:$0xff] %v1103
        %1168 = vst [vmem:[#allocation2 + $0x28] sm:$0xff] %v1104
        %1169 = vst [vmem:[#allocation2 + $0x30] sm:$0xff] %v1105
        %1170 = vst [vmem:[#allocation2 + $0x38] sm:$0xff] %v1106
        %1171 = vst [vmem:[#allocation2 + $0x40] sm:$0xff] %v1107
        %1172 = vst [vmem:[#allocation2 + $0x48] sm:$0xff] %v1108
        %1173 = vst [vmem:[#allocation2 + $0x50] sm:$0xff] %v1109
        %1174 = vst [vmem:[#allocation2 + $0x58] sm:$0xff] %v1110
        %1175 = vst [vmem:[#allocation2 + $0x60] sm:$0xff] %v1111
        %1176 = vst [vmem:[#allocation2 + $0x68] sm:$0xff] %v1112
        %1177 = vst [vmem:[#allocation2 + $0x70] sm:$0xff] %v1113
        %1178 = vst [vmem:[#allocation2 + $0x78] sm:$0xff] %v1114
        %1179 = vst [vmem:[#allocation2 + $0x80] sm:$0xff] %v1115
        %1180 = vst [vmem:[#allocation2 + $0x88] sm:$0xff] %v1116
        %1181 = vst [vmem:[#allocation2 + $0x90] sm:$0xff] %v1117
        %1182 = vst [vmem:[#allocation2 + $0x98] sm:$0xff] %v1118
        %1183 = vst [vmem:[#allocation2 + $0xa0] sm:$0xff] %v1119
        %1184 = vst [vmem:[#allocation2 + $0xa8] sm:$0xff] %v1120
        %1185 = vst [vmem:[#allocation2 + $0xb0] sm:$0xff] %v1121
        %1186 = vst [vmem:[#allocation2 + $0xb8] sm:$0xff] %v1122
        %1187 = vst [vmem:[#allocation2 + $0xc0] sm:$0xff] %v1123
        %1188 = vst [vmem:[#allocation2 + $0xc8] sm:$0xff] %v1124
        %1189 = vst [vmem:[#allocation2 + $0xd0] sm:$0xff] %v1125
        %1190 = vst [vmem:[#allocation2 + $0xd8] sm:$0xff] %v1126
        %1191 = vst [vmem:[#allocation2 + $0xe0] sm:$0xff] %v1127
        %1192 = vst [vmem:[#allocation2 + $0xe8] sm:$0xff] %v1128
        %1193 = vst [vmem:[#allocation2 + $0xf0] sm:$0xff] %v1129
        %1194 = vst [vmem:[#allocation2 + $0xf8] sm:$0xff] %v1130
        %1195 = vst [vmem:[#allocation2 + $0x100] sm:$0xff] %v1131
        %1196 = vst [vmem:[#allocation2 + $0x108] sm:$0xff] %v1132
        %1197 = vst [vmem:[#allocation2 + $0x110] sm:$0xff] %v1133
        %1198 = vst [vmem:[#allocation2 + $0x118] sm:$0xff] %v1134
        %1199 = vst [vmem:[#allocation2 + $0x120] sm:$0xff] %v1135
        %1200 = vst [vmem:[#allocation2 + $0x128] sm:$0xff] %v1136
        %1201 = vst [vmem:[#allocation2 + $0x130] sm:$0xff] %v1137
        %1202 = vst [vmem:[#allocation2 + $0x138] sm:$0xff] %v1138
        %1203 = vst [vmem:[#allocation2 + $0x140] sm:$0xff] %v1139
        %1204 = vst [vmem:[#allocation2 + $0x148] sm:$0xff] %v1140
        %1205 = vst [vmem:[#allocation2 + $0x150] sm:$0xff] %v1141
        %1206 = vst [vmem:[#allocation2 + $0x158] sm:$0xff] %v1142
        %1207 = vst [vmem:[#allocation2 + $0x160] sm:$0xff] %v1143
        %1208 = vst [vmem:[#allocation2 + $0x168] sm:$0xff] %v1144
        %1209 = vst [vmem:[#allocation2 + $0x170] sm:$0xff] %v1145
        %1210 = vst [vmem:[#allocation2 + $0x178] sm:$0xff] %v1146
        %1211 = vst [vmem:[#allocation2 + $0x180] sm:$0xff] %v1147
        %1212 = vst [vmem:[#allocation2 + $0x188] sm:$0xff] %v1148
        %1213 = vst [vmem:[#allocation2 + $0x190] sm:$0xff] %v1149
        %1214 = vst [vmem:[#allocation2 + $0x198] sm:$0xff] %v1150
        %1215 = vst [vmem:[#allocation2 + $0x1a0] sm:$0xff] %v1151
        %1216 = vst [vmem:[#allocation2 + $0x1a8] sm:$0xff] %v1152
        %1217 = vst [vmem:[#allocation2 + $0x1b0] sm:$0xff] %v1153
        %1218 = vst [vmem:[#allocation2 + $0x1b8] sm:$0xff] %v1154
        %1219 = vst [vmem:[#allocation2 + $0x1c0] sm:$0xff] %v1155
        %1220 = vst [vmem:[#allocation2 + $0x1c8] sm:$0xff] %v1156
        %1221 = vst [vmem:[#allocation2 + $0x1d0] sm:$0xff] %v1157
        %1222 = vst [vmem:[#allocation2 + $0x1d8] sm:$0xff] %v1158
        %1223 = vst [vmem:[#allocation2 + $0x1e0] sm:$0xff] %v1159
        %1224 = vst [vmem:[#allocation2 + $0x1e8] sm:$0xff] %v1160
        %1225 = vst [vmem:[#allocation2 + $0x1f0] sm:$0xff] %v1161
        %1226 = vst [vmem:[#allocation2 + $0x1f8] sm:$0xff] %v1162
        // Predicated region
        $region41: #{_lambda_.2} parent=31 // pred_check
          %p1227 = pneg %p341
        $region42: #{_lambda_.2} parent=31 // pred_check_branch
          %1229 = sbr.rel (%p1227) target = $region44
        $region43: #{_lambda_.2} parent=31 // pred_region
          %v1230 = vld [vmem:[#allocation2] sm:$0xff]
          %v1231 = vld [vmem:[#allocation2 + $0x8] sm:$0xff]
          %v1232 = vld [vmem:[#allocation2 + $0x10] sm:$0xff]
          %v1233 = vld [vmem:[#allocation2 + $0x18] sm:$0xff]
          %v1234 = vld [vmem:[#allocation2 + $0x20] sm:$0xff]
          %v1235 = vld [vmem:[#allocation2 + $0x28] sm:$0xff]
          %v1236 = vld [vmem:[#allocation2 + $0x30] sm:$0xff]
          %v1237 = vld [vmem:[#allocation2 + $0x38] sm:$0xff]
          %v1238 = vld [vmem:[#allocation2 + $0x40] sm:$0xff]
          %v1239 = vld [vmem:[#allocation2 + $0x48] sm:$0xff]
          %v1240 = vld [vmem:[#allocation2 + $0x50] sm:$0xff]
          %v1241 = vld [vmem:[#allocation2 + $0x58] sm:$0xff]
          %v1242 = vld [vmem:[#allocation2 + $0x60] sm:$0xff]
          %v1243 = vld [vmem:[#allocation2 + $0x68] sm:$0xff]
          %v1244 = vld [vmem:[#allocation2 + $0x70] sm:$0xff]
          %v1245 = vld [vmem:[#allocation2 + $0x78] sm:$0xff]
          %v1246 = vld [vmem:[#allocation2 + $0x80] sm:$0xff]
          %v1247 = vld [vmem:[#allocation2 + $0x88] sm:$0xff]
          %v1248 = vld [vmem:[#allocation2 + $0x90] sm:$0xff]
          %v1249 = vld [vmem:[#allocation2 + $0x98] sm:$0xff]
          %v1250 = vld [vmem:[#allocation2 + $0xa0] sm:$0xff]
          %v1251 = vld [vmem:[#allocation2 + $0xa8] sm:$0xff]
          %v1252 = vld [vmem:[#allocation2 + $0xb0] sm:$0xff]
          %v1253 = vld [vmem:[#allocation2 + $0xb8] sm:$0xff]
          %v1254 = vld [vmem:[#allocation2 + $0xc0] sm:$0xff]
          %v1255 = vld [vmem:[#allocation2 + $0xc8] sm:$0xff]
          %v1256 = vld [vmem:[#allocation2 + $0xd0] sm:$0xff]
          %v1257 = vld [vmem:[#allocation2 + $0xd8] sm:$0xff]
          %v1258 = vld [vmem:[#allocation2 + $0xe0] sm:$0xff]
          %v1259 = vld [vmem:[#allocation2 + $0xe8] sm:$0xff]
          %v1260 = vld [vmem:[#allocation2 + $0xf0] sm:$0xff]
          %v1261 = vld [vmem:[#allocation2 + $0xf8] sm:$0xff]
          %v1262 = vld [vmem:[#allocation2 + $0x100] sm:$0xff]
          %v1263 = vld [vmem:[#allocation2 + $0x108] sm:$0xff]
          %v1264 = vld [vmem:[#allocation2 + $0x110] sm:$0xff]
          %v1265 = vld [vmem:[#allocation2 + $0x118] sm:$0xff]
          %v1266 = vld [vmem:[#allocation2 + $0x120] sm:$0xff]
          %v1267 = vld [vmem:[#allocation2 + $0x128] sm:$0xff]
          %v1268 = vld [vmem:[#allocation2 + $0x130] sm:$0xff]
          %v1269 = vld [vmem:[#allocation2 + $0x138] sm:$0xff]
          %v1270 = vld [vmem:[#allocation2 + $0x140] sm:$0xff]
          %v1271 = vld [vmem:[#allocation2 + $0x148] sm:$0xff]
          %v1272 = vld [vmem:[#allocation2 + $0x150] sm:$0xff]
          %v1273 = vld [vmem:[#allocation2 + $0x158] sm:$0xff]
          %v1274 = vld [vmem:[#allocation2 + $0x160] sm:$0xff]
          %v1275 = vld [vmem:[#allocation2 + $0x168] sm:$0xff]
          %v1276 = vld [vmem:[#allocation2 + $0x170] sm:$0xff]
          %v1277 = vld [vmem:[#allocation2 + $0x178] sm:$0xff]
          %v1278 = vld [vmem:[#allocation2 + $0x180] sm:$0xff]
          %v1279 = vld [vmem:[#allocation2 + $0x188] sm:$0xff]
          %v1280 = vld [vmem:[#allocation2 + $0x190] sm:$0xff]
          %v1281 = vld [vmem:[#allocation2 + $0x198] sm:$0xff]
          %v1282 = vld [vmem:[#allocation2 + $0x1a0] sm:$0xff]
          %v1283 = vld [vmem:[#allocation2 + $0x1a8] sm:$0xff]
          %v1284 = vld [vmem:[#allocation2 + $0x1b0] sm:$0xff]
          %v1285 = vld [vmem:[#allocation2 + $0x1b8] sm:$0xff]
          %v1286 = vld [vmem:[#allocation2 + $0x1c0] sm:$0xff]
          %v1287 = vld [vmem:[#allocation2 + $0x1c8] sm:$0xff]
          %v1288 = vld [vmem:[#allocation2 + $0x1d0] sm:$0xff]
          %v1289 = vld [vmem:[#allocation2 + $0x1d8] sm:$0xff]
          %v1290 = vld [vmem:[#allocation2 + $0x1e0] sm:$0xff]
          %v1291 = vld [vmem:[#allocation2 + $0x1e8] sm:$0xff]
          %v1292 = vld [vmem:[#allocation2 + $0x1f0] sm:$0xff]
          %v1293 = vld [vmem:[#allocation2 + $0x1f8] sm:$0xff]
          %v1294 = vld [vmem:[%s318] sm:$0x1]
          %v1296 = vlaneseq
          %v1297 = vshrl.u32 %v1296, 7
          %v1298 = vsub.s32 0, %v1297
          %v1299 = vrot.slane %v1294, %v1298
          %v1301 = vadd.f32 %v1230, %v1299
          %v1302 = vadd.f32 %v1231, %v1299
          %v1303 = vadd.f32 %v1232, %v1299
          %v1304 = vadd.f32 %v1233, %v1299
          %v1305 = vadd.f32 %v1234, %v1299
          %v1306 = vadd.f32 %v1235, %v1299
          %v1307 = vadd.f32 %v1236, %v1299
          %v1308 = vadd.f32 %v1237, %v1299
          %v1309 = vadd.f32 %v1238, %v1299
          %v1310 = vadd.f32 %v1239, %v1299
          %v1311 = vadd.f32 %v1240, %v1299
          %v1312 = vadd.f32 %v1241, %v1299
          %v1313 = vadd.f32 %v1242, %v1299
          %v1314 = vadd.f32 %v1243, %v1299
          %v1315 = vadd.f32 %v1244, %v1299
          %v1316 = vadd.f32 %v1245, %v1299
          %v1317 = vadd.f32 %v1246, %v1299
          %v1318 = vadd.f32 %v1247, %v1299
          %v1319 = vadd.f32 %v1248, %v1299
          %v1320 = vadd.f32 %v1249, %v1299
          %v1321 = vadd.f32 %v1250, %v1299
          %v1322 = vadd.f32 %v1251, %v1299
          %v1323 = vadd.f32 %v1252, %v1299
          %v1324 = vadd.f32 %v1253, %v1299
          %v1325 = vadd.f32 %v1254, %v1299
          %v1326 = vadd.f32 %v1255, %v1299
          %v1327 = vadd.f32 %v1256, %v1299
          %v1328 = vadd.f32 %v1257, %v1299
          %v1329 = vadd.f32 %v1258, %v1299
          %v1330 = vadd.f32 %v1259, %v1299
          %v1331 = vadd.f32 %v1260, %v1299
          %v1332 = vadd.f32 %v1261, %v1299
          %v1333 = vadd.f32 %v1262, %v1299
          %v1334 = vadd.f32 %v1263, %v1299
          %v1335 = vadd.f32 %v1264, %v1299
          %v1336 = vadd.f32 %v1265, %v1299
          %v1337 = vadd.f32 %v1266, %v1299
          %v1338 = vadd.f32 %v1267, %v1299
          %v1339 = vadd.f32 %v1268, %v1299
          %v1340 = vadd.f32 %v1269, %v1299
          %v1341 = vadd.f32 %v1270, %v1299
          %v1342 = vadd.f32 %v1271, %v1299
          %v1343 = vadd.f32 %v1272, %v1299
          %v1344 = vadd.f32 %v1273, %v1299
          %v1345 = vadd.f32 %v1274, %v1299
          %v1346 = vadd.f32 %v1275, %v1299
          %v1347 = vadd.f32 %v1276, %v1299
          %v1348 = vadd.f32 %v1277, %v1299
          %v1349 = vadd.f32 %v1278, %v1299
          %v1350 = vadd.f32 %v1279, %v1299
          %v1351 = vadd.f32 %v1280, %v1299
          %v1352 = vadd.f32 %v1281, %v1299
          %v1353 = vadd.f32 %v1282, %v1299
          %v1354 = vadd.f32 %v1283, %v1299
          %v1355 = vadd.f32 %v1284, %v1299
          %v1356 = vadd.f32 %v1285, %v1299
          %v1357 = vadd.f32 %v1286, %v1299
          %v1358 = vadd.f32 %v1287, %v1299
          %v1359 = vadd.f32 %v1288, %v1299
          %v1360 = vadd.f32 %v1289, %v1299
          %v1361 = vadd.f32 %v1290, %v1299
          %v1362 = vadd.f32 %v1291, %v1299
          %v1363 = vadd.f32 %v1292, %v1299
          %v1364 = vadd.f32 %v1293, %v1299
          %1365 = vst [vmem:[%s326] sm:$0xff] %v1301
          %1366 = vst [vmem:[%s326 + $0x8] sm:$0xff] %v1302
          %1367 = vst [vmem:[%s326 + $0x10] sm:$0xff] %v1303
          %1368 = vst [vmem:[%s326 + $0x18] sm:$0xff] %v1304
          %1369 = vst [vmem:[%s326 + $0x20] sm:$0xff] %v1305
          %1370 = vst [vmem:[%s326 + $0x28] sm:$0xff] %v1306
          %1371 = vst [vmem:[%s326 + $0x30] sm:$0xff] %v1307
          %1372 = vst [vmem:[%s326 + $0x38] sm:$0xff] %v1308
          %1373 = vst [vmem:[%s326 + $0x40] sm:$0xff] %v1309
          %1374 = vst [vmem:[%s326 + $0x48] sm:$0xff] %v1310
          %1375 = vst [vmem:[%s326 + $0x50] sm:$0xff] %v1311
          %1376 = vst [vmem:[%s326 + $0x58] sm:$0xff] %v1312
          %1377 = vst [vmem:[%s326 + $0x60] sm:$0xff] %v1313
          %1378 = vst [vmem:[%s326 + $0x68] sm:$0xff] %v1314
          %1379 = vst [vmem:[%s326 + $0x70] sm:$0xff] %v1315
          %1380 = vst [vmem:[%s326 + $0x78] sm:$0xff] %v1316
          %1381 = vst [vmem:[%s326 + $0x80] sm:$0xff] %v1317
          %1382 = vst [vmem:[%s326 + $0x88] sm:$0xff] %v1318
          %1383 = vst [vmem:[%s326 + $0x90] sm:$0xff] %v1319
          %1384 = vst [vmem:[%s326 + $0x98] sm:$0xff] %v1320
          %1385 = vst [vmem:[%s326 + $0xa0] sm:$0xff] %v1321
          %1386 = vst [vmem:[%s326 + $0xa8] sm:$0xff] %v1322
          %1387 = vst [vmem:[%s326 + $0xb0] sm:$0xff] %v1323
          %1388 = vst [vmem:[%s326 + $0xb8] sm:$0xff] %v1324
          %1389 = vst [vmem:[%s326 + $0xc0] sm:$0xff] %v1325
          %1390 = vst [vmem:[%s326 + $0xc8] sm:$0xff] %v1326
          %1391 = vst [vmem:[%s326 + $0xd0] sm:$0xff] %v1327
          %1392 = vst [vmem:[%s326 + $0xd8] sm:$0xff] %v1328
          %1393 = vst [vmem:[%s326 + $0xe0] sm:$0xff] %v1329
          %1394 = vst [vmem:[%s326 + $0xe8] sm:$0xff] %v1330
          %1395 = vst [vmem:[%s326 + $0xf0] sm:$0xff] %v1331
          %1396 = vst [vmem:[%s326 + $0xf8] sm:$0xff] %v1332
          %1397 = vst [vmem:[%s326 + $0x100] sm:$0xff] %v1333
          %1398 = vst [vmem:[%s326 + $0x108] sm:$0xff] %v1334
          %1399 = vst [vmem:[%s326 + $0x110] sm:$0xff] %v1335
          %1400 = vst [vmem:[%s326 + $0x118] sm:$0xff] %v1336
          %1401 = vst [vmem:[%s326 + $0x120] sm:$0xff] %v1337
          %1402 = vst [vmem:[%s326 + $0x128] sm:$0xff] %v1338
          %1403 = vst [vmem:[%s326 + $0x130] sm:$0xff] %v1339
          %1404 = vst [vmem:[%s326 + $0x138] sm:$0xff] %v1340
          %1405 = vst [vmem:[%s326 + $0x140] sm:$0xff] %v1341
          %1406 = vst [vmem:[%s326 + $0x148] sm:$0xff] %v1342
          %1407 = vst [vmem:[%s326 + $0x150] sm:$0xff] %v1343
          %1408 = vst [vmem:[%s326 + $0x158] sm:$0xff] %v1344
          %1409 = vst [vmem:[%s326 + $0x160] sm:$0xff] %v1345
          %1410 = vst [vmem:[%s326 + $0x168] sm:$0xff] %v1346
          %1411 = vst [vmem:[%s326 + $0x170] sm:$0xff] %v1347
          %1412 = vst [vmem:[%s326 + $0x178] sm:$0xff] %v1348
          %1413 = vst [vmem:[%s326 + $0x180] sm:$0xff] %v1349
          %1414 = vst [vmem:[%s326 + $0x188] sm:$0xff] %v1350
          %1415 = vst [vmem:[%s326 + $0x190] sm:$0xff] %v1351
          %1416 = vst [vmem:[%s326 + $0x198] sm:$0xff] %v1352
          %1417 = vst [vmem:[%s326 + $0x1a0] sm:$0xff] %v1353
          %1418 = vst [vmem:[%s326 + $0x1a8] sm:$0xff] %v1354
          %1419 = vst [vmem:[%s326 + $0x1b0] sm:$0xff] %v1355
          %1420 = vst [vmem:[%s326 + $0x1b8] sm:$0xff] %v1356
          %1421 = vst [vmem:[%s326 + $0x1c0] sm:$0xff] %v1357
          %1422 = vst [vmem:[%s326 + $0x1c8] sm:$0xff] %v1358
          %1423 = vst [vmem:[%s326 + $0x1d0] sm:$0xff] %v1359
          %1424 = vst [vmem:[%s326 + $0x1d8] sm:$0xff] %v1360
          %1425 = vst [vmem:[%s326 + $0x1e0] sm:$0xff] %v1361
          %1426 = vst [vmem:[%s326 + $0x1e8] sm:$0xff] %v1362
          %1427 = vst [vmem:[%s326 + $0x1f0] sm:$0xff] %v1363
          %1428 = vst [vmem:[%s326 + $0x1f8] sm:$0xff] %v1364
          %v1429 = vadd.f32 %v1301, %v1302
          %v1430 = vadd.f32 %v1429, %v1303
          %v1431 = vadd.f32 %v1430, %v1304
          %v1432 = vadd.f32 %v1431, %v1305
          %v1433 = vadd.f32 %v1432, %v1306
          %v1434 = vadd.f32 %v1433, %v1307
          %v1435 = vadd.f32 %v1434, %v1308
          %v1436 = vadd.f32 %v1435, %v1309
          %v1437 = vadd.f32 %v1436, %v1310
          %v1438 = vadd.f32 %v1437, %v1311
          %v1439 = vadd.f32 %v1438, %v1312
          %v1440 = vadd.f32 %v1439, %v1313
          %v1441 = vadd.f32 %v1440, %v1314
          %v1442 = vadd.f32 %v1441, %v1315
          %v1443 = vadd.f32 %v1442, %v1316
          %v1444 = vadd.f32 %v1443, %v1317
          %v1445 = vadd.f32 %v1444, %v1318
          %v1446 = vadd.f32 %v1445, %v1319
          %v1447 = vadd.f32 %v1446, %v1320
          %v1448 = vadd.f32 %v1447, %v1321
          %v1449 = vadd.f32 %v1448, %v1322
          %v1450 = vadd.f32 %v1449, %v1323
          %v1451 = vadd.f32 %v1450, %v1324
          %v1452 = vadd.f32 %v1451, %v1325
          %v1453 = vadd.f32 %v1452, %v1326
          %v1454 = vadd.f32 %v1453, %v1327
          %v1455 = vadd.f32 %v1454, %v1328
          %v1456 = vadd.f32 %v1455, %v1329
          %v1457 = vadd.f32 %v1456, %v1330
          %v1458 = vadd.f32 %v1457, %v1331
          %v1459 = vadd.f32 %v1458, %v1332
          %v1460 = vadd.f32 %v1459, %v1333
          %v1461 = vadd.f32 %v1460, %v1334
          %v1462 = vadd.f32 %v1461, %v1335
          %v1463 = vadd.f32 %v1462, %v1336
          %v1464 = vadd.f32 %v1463, %v1337
          %v1465 = vadd.f32 %v1464, %v1338
          %v1466 = vadd.f32 %v1465, %v1339
          %v1467 = vadd.f32 %v1466, %v1340
          %v1468 = vadd.f32 %v1467, %v1341
          %v1469 = vadd.f32 %v1468, %v1342
          %v1470 = vadd.f32 %v1469, %v1343
          %v1471 = vadd.f32 %v1470, %v1344
          %v1472 = vadd.f32 %v1471, %v1345
          %v1473 = vadd.f32 %v1472, %v1346
          %v1474 = vadd.f32 %v1473, %v1347
          %v1475 = vadd.f32 %v1474, %v1348
          %v1476 = vadd.f32 %v1475, %v1349
          %v1477 = vadd.f32 %v1476, %v1350
          %v1478 = vadd.f32 %v1477, %v1351
          %v1479 = vadd.f32 %v1478, %v1352
          %v1480 = vadd.f32 %v1479, %v1353
          %v1481 = vadd.f32 %v1480, %v1354
          %v1482 = vadd.f32 %v1481, %v1355
          %v1483 = vadd.f32 %v1482, %v1356
          %v1484 = vadd.f32 %v1483, %v1357
          %v1485 = vadd.f32 %v1484, %v1358
          %v1486 = vadd.f32 %v1485, %v1359
          %v1487 = vadd.f32 %v1486, %v1360
          %v1488 = vadd.f32 %v1487, %v1361
          %v1489 = vadd.f32 %v1488, %v1362
          %v1490 = vadd.f32 %v1489, %v1363
          %v1491 = vadd.f32 %v1490, %v1364
          %v1492 = vrot.slane %v1491, 4
          %v1493 = vadd.f32 %v1491, %v1492
          %v1494 = vrot.slane %v1493, 2
          %v1495 = vadd.f32 %v1493, %v1494
          %v1496 = vrot.slane %v1495, 1
          %v1497 = vadd.f32 %v1495, %v1496
          %1498 = vst [vmem:[%s333] sm:$0x1] %v1497
          %v1499 = vmul.f32 %v1301, %v1301
          %v1500 = vmul.f32 %v1302, %v1302
          %v1501 = vmul.f32 %v1303, %v1303
          %v1502 = vmul.f32 %v1304, %v1304
          %v1503 = vmul.f32 %v1305, %v1305
          %v1504 = vmul.f32 %v1306, %v1306
          %v1505 = vmul.f32 %v1307, %v1307
          %v1506 = vmul.f32 %v1308, %v1308
          %v1507 = vmul.f32 %v1309, %v1309
          %v1508 = vmul.f32 %v1310, %v1310
          %v1509 = vmul.f32 %v1311, %v1311
          %v1510 = vmul.f32 %v1312, %v1312
          %v1511 = vmul.f32 %v1313, %v1313
          %v1512 = vmul.f32 %v1314, %v1314
          %v1513 = vmul.f32 %v1315, %v1315
          %v1514 = vmul.f32 %v1316, %v1316
          %v1515 = vmul.f32 %v1317, %v1317
          %v1516 = vmul.f32 %v1318, %v1318
          %v1517 = vmul.f32 %v1319, %v1319
          %v1518 = vmul.f32 %v1320, %v1320
          %v1519 = vmul.f32 %v1321, %v1321
          %v1520 = vmul.f32 %v1322, %v1322
          %v1521 = vmul.f32 %v1323, %v1323
          %v1522 = vmul.f32 %v1324, %v1324
          %v1523 = vmul.f32 %v1325, %v1325
          %v1524 = vmul.f32 %v1326, %v1326
          %v1525 = vmul.f32 %v1327, %v1327
          %v1526 = vmul.f32 %v1328, %v1328
          %v1527 = vmul.f32 %v1329, %v1329
          %v1528 = vmul.f32 %v1330, %v1330
          %v1529 = vmul.f32 %v1331, %v1331
          %v1530 = vmul.f32 %v1332, %v1332
          %v1531 = vmul.f32 %v1333, %v1333
          %v1532 = vmul.f32 %v1334, %v1334
          %v1533 = vmul.f32 %v1335, %v1335
          %v1534 = vmul.f32 %v1336, %v1336
          %v1535 = vmul.f32 %v1337, %v1337
          %v1536 = vmul.f32 %v1338, %v1338
          %v1537 = vmul.f32 %v1339, %v1339
          %v1538 = vmul.f32 %v1340, %v1340
          %v1539 = vmul.f32 %v1341, %v1341
          %v1540 = vmul.f32 %v1342, %v1342
          %v1541 = vmul.f32 %v1343, %v1343
          %v1542 = vmul.f32 %v1344, %v1344
          %v1543 = vmul.f32 %v1345, %v1345
          %v1544 = vmul.f32 %v1346, %v1346
          %v1545 = vmul.f32 %v1347, %v1347
          %v1546 = vmul.f32 %v1348, %v1348
          %v1547 = vmul.f32 %v1349, %v1349
          %v1548 = vmul.f32 %v1350, %v1350
          %v1549 = vmul.f32 %v1351, %v1351
          %v1550 = vmul.f32 %v1352, %v1352
          %v1551 = vmul.f32 %v1353, %v1353
          %v1552 = vmul.f32 %v1354, %v1354
          %v1553 = vmul.f32 %v1355, %v1355
          %v1554 = vmul.f32 %v1356, %v1356
          %v1555 = vmul.f32 %v1357, %v1357
          %v1556 = vmul.f32 %v1358, %v1358
          %v1557 = vmul.f32 %v1359, %v1359
          %v1558 = vmul.f32 %v1360, %v1360
          %v1559 = vmul.f32 %v1361, %v1361
          %v1560 = vmul.f32 %v1362, %v1362
          %v1561 = vmul.f32 %v1363, %v1363
          %v1562 = vmul.f32 %v1364, %v1364
          %v1563 = vadd.f32 %v1499, %v1500
          %v1564 = vadd.f32 %v1563, %v1501
          %v1565 = vadd.f32 %v1564, %v1502
          %v1566 = vadd.f32 %v1565, %v1503
          %v1567 = vadd.f32 %v1566, %v1504
          %v1568 = vadd.f32 %v1567, %v1505
          %v1569 = vadd.f32 %v1568, %v1506
          %v1570 = vadd.f32 %v1569, %v1507
          %v1571 = vadd.f32 %v1570, %v1508
          %v1572 = vadd.f32 %v1571, %v1509
          %v1573 = vadd.f32 %v1572, %v1510
          %v1574 = vadd.f32 %v1573, %v1511
          %v1575 = vadd.f32 %v1574, %v1512
          %v1576 = vadd.f32 %v1575, %v1513
          %v1577 = vadd.f32 %v1576, %v1514
          %v1578 = vadd.f32 %v1577, %v1515
          %v1579 = vadd.f32 %v1578, %v1516
          %v1580 = vadd.f32 %v1579, %v1517
          %v1581 = vadd.f32 %v1580, %v1518
          %v1582 = vadd.f32 %v1581, %v1519
          %v1583 = vadd.f32 %v1582, %v1520
          %v1584 = vadd.f32 %v1583, %v1521
          %v1585 = vadd.f32 %v1584, %v1522
          %v1586 = vadd.f32 %v1585, %v1523
          %v1587 = vadd.f32 %v1586, %v1524
          %v1588 = vadd.f32 %v1587, %v1525
          %v1589 = vadd.f32 %v1588, %v1526
          %v1590 = vadd.f32 %v1589, %v1527
          %v1591 = vadd.f32 %v1590, %v1528
          %v1592 = vadd.f32 %v1591, %v1529
          %v1593 = vadd.f32 %v1592, %v1530
          %v1594 = vadd.f32 %v1593, %v1531
          %v1595 = vadd.f32 %v1594, %v1532
          %v1596 = vadd.f32 %v1595, %v1533
          %v1597 = vadd.f32 %v1596, %v1534
          %v1598 = vadd.f32 %v1597, %v1535
          %v1599 = vadd.f32 %v1598, %v1536
          %v1600 = vadd.f32 %v1599, %v1537
          %v1601 = vadd.f32 %v1600, %v1538
          %v1602 = vadd.f32 %v1601, %v1539
          %v1603 = vadd.f32 %v1602, %v1540
          %v1604 = vadd.f32 %v1603, %v1541
          %v1605 = vadd.f32 %v1604, %v1542
          %v1606 = vadd.f32 %v1605, %v1543
          %v1607 = vadd.f32 %v1606, %v1544
          %v1608 = vadd.f32 %v1607, %v1545
          %v1609 = vadd.f32 %v1608, %v1546
          %v1610 = vadd.f32 %v1609, %v1547
          %v1611 = vadd.f32 %v1610, %v1548
          %v1612 = vadd.f32 %v1611, %v1549
          %v1613 = vadd.f32 %v1612, %v1550
          %v1614 = vadd.f32 %v1613, %v1551
          %v1615 = vadd.f32 %v1614, %v1552
          %v1616 = vadd.f32 %v1615, %v1553
          %v1617 = vadd.f32 %v1616, %v1554
          %v1618 = vadd.f32 %v1617, %v1555
          %v1619 = vadd.f32 %v1618, %v1556
          %v1620 = vadd.f32 %v1619, %v1557
          %v1621 = vadd.f32 %v1620, %v1558
          %v1622 = vadd.f32 %v1621, %v1559
          %v1623 = vadd.f32 %v1622, %v1560
          %v1624 = vadd.f32 %v1623, %v1561
          %v1625 = vadd.f32 %v1624, %v1562
          %v1626 = vrot.slane %v1625, 4
          %v1627 = vadd.f32 %v1625, %v1626
          %v1628 = vrot.slane %v1627, 2
          %v1629 = vadd.f32 %v1627, %v1628
          %v1630 = vrot.slane %v1629, 1
          %v1631 = vadd.f32 %v1629, %v1630
          %1632 = vst [vmem:[%s339] sm:$0x1] %v1631
        $region44: #{_lambda_.2} parent=31 // pred_fallthru
          _
        %s1633 = smul.u32 64, %s23
        %p1634 = scmp.lt.s32.totalorder %s1633, 255
        %s1635 = scalar_select %p1634, %s1633, 255
        %p1636 = scmp.lt.s32.totalorder %s24, 0
        %s1637 = scalar_select %p1636, %s24, 0
        %s1638 = sadd.s32 %s1637, %s1635
        %s1639 = smul.addr %s1638, 8
        %s1640 = scalar_lea.vmem %s3, %s1639
        %p1641 = scmp.lt.s32.totalorder %s23, 3
        %s1642 = scalar_select %p1641, %s23, 3
        %p1643 = scmp.lt.s32.totalorder %s24, 0
        %s1644 = scalar_select %p1643, %s24, 0
        %s1645 = sadd.s32 %s1644, %s1642
        %s1646 = scalar_lea.vmem %s4, %s1645
        %p1647 = scmp.lt.s32.totalorder %s23, 3
        %s1648 = scalar_select %p1647, %s23, 3
        %p1649 = scmp.lt.s32.totalorder %s24, 0
        %s1650 = scalar_select %p1649, %s24, 0
        %s1651 = sadd.s32 %s1650, %s1648
        %s1652 = scalar_lea.vmem %s5, %s1651
        // Predicated region
        $region45: #{_lambda_.2} parent=31 // pred_check
          %p1653 = pneg %p139
        $region46: #{_lambda_.2} parent=31 // pred_check_branch
          %1655 = sbr.rel (%p1653) target = $region48
        $region47: #{_lambda_.2} parent=31 // pred_region
          %s1656 = smul.u32 64, %s23
        $region48: #{_lambda_.2} parent=31 // pred_fallthru
          _
        // Predicated region
        $region49: #{_lambda_.2} parent=31 // pred_check
          %p1657 = pneg %p167
        $region50: #{_lambda_.2} parent=31 // pred_check_branch
          %1659 = sbr.rel (%p1657) target = $region52
        $region51: #{_lambda_.2} parent=31 // pred_region
          _
        $region52: #{_lambda_.2} parent=31 // pred_fallthru
          _
        // Predicated region
        $region53: #{_lambda_.2} parent=31 // pred_check
          %p1660 = pneg %p195
        $region54: #{_lambda_.2} parent=31 // pred_check_branch
          %1662 = sbr.rel (%p1660) target = $region56
        $region55: #{_lambda_.2} parent=31 // pred_region
          _
        $region56: #{_lambda_.2} parent=31 // pred_fallthru
          _
      $region32: #{_lambda_.2} parent=5 // pred_fallthru
        _
      %p1663 = scmp.le.s32.totalorder 2, %s13
      // Predicated region
      $region57: #{_lambda_.2} parent=5 // pred_check
        %p1664 = pneg %p1663
      $region58: #{_lambda_.2} parent=5 // pred_check_branch
        %1666 = sbr.rel (%p1664) target = $region60
      $region59: #{_lambda_.2} parent=5 // pred_region
        %s1667 = ssub.s32 %s13, 2
        // Predicated region
        $region61: #{_lambda_.2} parent=59 // pred_check
          %p1668 = pneg %p145
        $region62: #{_lambda_.2} parent=59 // pred_check_branch
          %1670 = sbr.rel (%p1668) target = $region64
        $region63: #{_lambda_.2} parent=59 // pred_region
          %s1671 = smul.u32 64, %s26
          %p1672 = scmp.lt.s32.totalorder %s1671, 255
          %s1673 = scalar_select %p1672, %s1671, 255
          %p1674 = scmp.lt.s32.totalorder %s27, 0
          %s1675 = scalar_select %p1674, %s27, 0
          %s1676 = sadd.s32 %s1675, %s1673
          %s1677 = smul.addr %s1676, 8
          %s1678 = scalar_lea.vmem %s3, %s1677
        $region64: #{_lambda_.2} parent=59 // pred_fallthru
          _
        // Predicated region
        $region65: #{_lambda_.2} parent=59 // pred_check
          %p1679 = pneg %p173
        $region66: #{_lambda_.2} parent=59 // pred_check_branch
          %1681 = sbr.rel (%p1679) target = $region68
        $region67: #{_lambda_.2} parent=59 // pred_region
          %p1682 = scmp.lt.s32.totalorder %s26, 3
          %s1683 = scalar_select %p1682, %s26, 3
          %p1684 = scmp.lt.s32.totalorder %s27, 0
          %s1685 = scalar_select %p1684, %s27, 0
          %s1686 = sadd.s32 %s1685, %s1683
          %s1687 = scalar_lea.vmem %s4, %s1686
        $region68: #{_lambda_.2} parent=59 // pred_fallthru
          _
        // Predicated region
        $region69: #{_lambda_.2} parent=59 // pred_check
          %p1688 = pneg %p201
        $region70: #{_lambda_.2} parent=59 // pred_check_branch
          %1690 = sbr.rel (%p1688) target = $region72
        $region71: #{_lambda_.2} parent=59 // pred_region
          %p1691 = scmp.lt.s32.totalorder %s26, 3
          %s1692 = scalar_select %p1691, %s26, 3
          %p1693 = scmp.lt.s32.totalorder %s27, 0
          %s1694 = scalar_select %p1693, %s27, 0
          %s1695 = sadd.s32 %s1694, %s1692
          %s1696 = scalar_lea.vmem %s5, %s1695
        $region72: #{_lambda_.2} parent=59 // pred_fallthru
          _
      $region60: #{_lambda_.2} parent=5 // pred_fallthru
        _
    $region6: #{_lambda_.2} parent=1 // loop_footer
      %s17 = sadd.s32 1, %s13
    $region7: #{_lambda_.2} parent=1 // loop_footer_branch
      %12 = sbr.rel target = $region3
    $region8: #{_lambda_.2} parent=1 // loop_exit
      _
    %1697 = vsyncpa [#allocation4], 1
    %s1698 = scalar_lea.sflag [#allocation4], 1
    %1699 = vsyncpa %s1698, 1

</llo_original>
